<compile_context>
chip_gen: v5e
topology: v5e:2x2
jax: 0.10.0
libtpu: 0.0.40
codegen_flags: <defaults>
</compile_context>

<pallas_src>
import jax
import jax.numpy as jnp
from jax.experimental import pallas as pl
from jax.experimental.pallas import tpu as pltpu

# ------------------------- static layout constants -------------------------
C_IN = 3            # input channels
C1, C2 = 10, 20     # conv1 / conv2 output channels
KSZ = 3             # conv kernel size (both convs)
K5 = 2 * KSZ - 1    # composed conv kernel size (5)
COUT_P = 24         # composed-conv output channels, padded to sublane multiple
KP = 80             # composed-conv contraction dim 3*5*5 = 75, padded to 80
N1P = 64            # fc1 output 50, padded
N2P = 128           # fc2 output 10, padded to a full lane tile


# ------------------------------ Pallas kernels ------------------------------

def _conv_relu_pool_kernel(p_ref, w_ref, b_ref, o_ref):
    """Composed 5x5 conv + bias + ReLU + 2x2 max-pool for ONE image.

    p_ref: (4, KP, S)   bf16  phase-split im2col patches (S = 14*14 = 196)
    w_ref: (COUT_P, KP) bf16  composed conv weights (zero padded)
    b_ref: (COUT_P, 1)  f32   composed conv bias (zero padded)
    o_ref: (COUT_P, S)  f32   pooled activations, lane-dense last dim
    """
    w = w_ref[...]
    acc = jnp.dot(w, p_ref[0], preferred_element_type=jnp.float32)
    for q in range(1, 4):                    # max over the 4 pooling phases
        acc = jnp.maximum(
            acc, jnp.dot(w, p_ref[q], preferred_element_type=jnp.float32))
    # bias is common to all phases, so adding it after the max is exact;
    # relu(max(.)) == max(relu(.)) since relu is monotone.
    o_ref[...] = jnp.maximum(acc + b_ref[...], 0.0)


def conv_relu_pool(patches, w_flat, b_col):
    """patches: (B, 4, KP, S) bf16 -> (B, COUT_P, S) f32 pooled activations."""
    B, nphase, kp, s = patches.shape
    cout = w_flat.shape[0]
    return pl.pallas_call(
        _conv_relu_pool_kernel,
        out_shape=jax.ShapeDtypeStruct((B, cout, s), jnp.float32),
        grid=(B,),
        in_specs=[
            pl.BlockSpec((None, nphase, kp, s), lambda b: (b, 0, 0, 0)),
            pl.BlockSpec((cout, kp), lambda b: (0, 0)),
            pl.BlockSpec((cout, 1), lambda b: (0, 0)),
        ],
        out_specs=pl.BlockSpec((None, cout, s), lambda b: (b, 0, 0)),
        compiler_params=pltpu.CompilerParams(
            dimension_semantics=("parallel",)),
    )(patches, w_flat, b_col)


def _fc_fused_kernel(x_ref, w1_ref, b1_ref, w2_ref, b2_ref, o_ref):
    """fc1 + bias + ReLU + fc2 + bias; the intermediate never leaves VMEM.

    x_ref: (B, F) bf16   w1_ref: (F, N1P) bf16   b1_ref: (1, N1P) f32
    w2_ref: (N1P, N2P) bf16   b2_ref: (1, N2P) f32   o_ref: (B, N2P) f32
    """
    h = jnp.dot(x_ref[...], w1_ref[...], preferred_element_type=jnp.float32)
    h = jnp.maximum(h + b1_ref[...], 0.0)
    z = jnp.dot(h.astype(jnp.bfloat16), w2_ref[...],
                preferred_element_type=jnp.float32)
    o_ref[...] = z + b2_ref[...]


def fc_fused(flat, w1, b1, w2, b2):
    B = flat.shape[0]
    return pl.pallas_call(
        _fc_fused_kernel,
        out_shape=jax.ShapeDtypeStruct((B, w2.shape[1]), jnp.float32),
        in_specs=[pl.BlockSpec(memory_space=pltpu.MemorySpace.VMEM)] * 5,
        out_specs=pl.BlockSpec(memory_space=pltpu.MemorySpace.VMEM),
    )(flat, w1, b1, w2, b2)


# --------------------- XLA-side layout glue (per forward) -------------------

def _phase_patches(x):
    """Phase-split im2col for the composed 5x5 conv + 2x2 max-pool.

    x: (B, 3, H, W) NCHW -> (B, 4, KP, HO*WO) bf16, where for phase (dy,dx),
    row k = ci*25 + p*5 + r and column s = i*WO + j holds
    x[b, ci, 2i+dy+p, 2j+dx+r].
    """
    B, C, H, W = x.shape
    HO, WO = (H - K5 + 1) // 2, (W - K5 + 1) // 2
    phases = []
    for dy in range(2):
        for dx in range(2):
            cols = [x[:, :, dy + p: dy + p + 2 * HO - 1: 2,
                          dx + r: dx + r + 2 * WO - 1: 2]
                    for p in range(K5) for r in range(K5)]
            ph = jnp.stack(cols, axis=2)              # (B, C, 25, HO, WO)
            phases.append(ph.reshape(B, C * K5 * K5, HO * WO))
    patches = jnp.stack(phases, axis=1)               # (B, 4, 75, HO*WO)
    patches = jnp.pad(patches,
                      ((0, 0), (0, 0), (0, KP - C * K5 * K5), (0, 0)))
    return patches.astype(jnp.bfloat16)


# ------------------------------ parameters ------------------------------

def init_params(key):
    ks = jax.random.split(key, 8)

    def u(k, shape, fan_in):
        bound = 1.0 / (fan_in ** 0.5)
        return jax.random.uniform(k, shape, jnp.float32, -bound, bound)

    return {
        "conv1_w": u(ks[0], (C1, C_IN, KSZ, KSZ), C_IN * KSZ * KSZ),
        "conv1_b": u(ks[1], (C1,), C_IN * KSZ * KSZ),
        "conv2_w": u(ks[2], (C2, C1, KSZ, KSZ), C1 * KSZ * KSZ),
        "conv2_b": u(ks[3], (C2,), C1 * KSZ * KSZ),
        "fc1_w":   u(ks[4], (50, 3920), 3920),
        "fc1_b":   u(ks[5], (50,), 3920),
        "fc2_w":   u(ks[6], (10, 50), 50),
        "fc2_b":   u(ks[7], (10,), 50),
    }


def prepare_params(params):
    """One-time transform of PyTorch-layout weights into kernel layouts."""
    w1, b1 = params["conv1_w"], params["conv1_b"]
    w2, b2 = params["conv2_w"], params["conv2_b"]

    # Exact composition conv2(conv1(x)) -> one 5x5 conv (no nonlinearity
    # between the two convs; dropout is identity at inference).
    wc = jnp.zeros((C2, C_IN, K5, K5), jnp.float32)
    for r in range(KSZ):
        for s in range(KSZ):
            wc = wc.at[:, :, r:r + KSZ, s:s + KSZ].add(
                jnp.einsum("om,micd->oicd", w2[:, :, r, s], w1))
    bc = b2 + jnp.einsum("omrs,m->o", w2, b1)

    wc_flat = jnp.pad(wc.reshape(C2, C_IN * K5 * K5),
                      ((0, COUT_P - C2), (0, KP - C_IN * K5 * K5)))
    b_col = jnp.pad(bc, (0, COUT_P - C2)).reshape(COUT_P, 1)

    s_pool = 14 * 14
    f_real, f_pad = C2 * s_pool, COUT_P * s_pool      # 3920, 4704
    fc1_w = jnp.zeros((f_pad, N1P), jnp.float32).at[:f_real, :50].set(
        params["fc1_w"].T)
    fc1_b = jnp.pad(params["fc1_b"], (0, N1P - 50)).reshape(1, N1P)
    fc2_w = jnp.zeros((N1P, N2P), jnp.float32).at[:50, :10].set(
        params["fc2_w"].T)
    fc2_b = jnp.pad(params["fc2_b"], (0, N2P - 10)).reshape(1, N2P)

    return {
        "convp_w": wc_flat.astype(jnp.bfloat16),
        "convp_b": b_col.astype(jnp.float32),
        "fc1_w": fc1_w.astype(jnp.bfloat16),
        "fc1_b": fc1_b.astype(jnp.float32),
        "fc2_w": fc2_w.astype(jnp.bfloat16),
        "fc2_b": fc2_b.astype(jnp.float32),
    }


# ------------------------------ model ------------------------------

def model_fc_forward(prepped, x):
    """conv1 -> conv2 -> dropout(id) -> relu -> maxpool(2) -> flatten
       -> fc1 -> relu -> dropout(id) -> fc2, as two Pallas kernels."""
    B = x.shape[0]
    patches = _phase_patches(x)                               # XLA layout glue
    pooled = conv_relu_pool(patches, prepped["convp_w"], prepped["convp_b"])
    # Row-major flatten of (COUT_P, 196) matches the PyTorch CHW flatten for
    # the first 20 channels; padded channels are exactly zero and hit zero
    # rows of the padded fc1 weight.
    flat = pooled.reshape(B, -1).astype(jnp.bfloat16)         # (B, 24*196)
    logits = fc_fused(flat, prepped["fc1_w"], prepped["fc1_b"],
                      prepped["fc2_w"], prepped["fc2_b"])     # (B, 128)
    return logits[:, :10]


def reference_forward(params, x):
    dn = ("NCHW", "OIHW", "NCHW")
    h = jax.lax.conv_general_dilated(
        x, params["conv1_w"], (1, 1), "VALID",
        dimension_numbers=jax.lax.conv_dimension_numbers(
            x.shape, params["conv1_w"].shape, dn))
    h = h + params["conv1_b"][None, :, None, None]
    h = jax.lax.conv_general_dilated(
        h, params["conv2_w"], (1, 1), "VALID",
        dimension_numbers=jax.lax.conv_dimension_numbers(
            h.shape, params["conv2_w"].shape, dn))
    h = h + params["conv2_b"][None, :, None, None]
    h = jnp.maximum(h, 0.0)
    B, C, H, W = h.shape
    h = h.reshape(B, C, H // 2, 2, W // 2, 2).max(axis=(3, 5))
    h = h.reshape(B, -1)
    h = jnp.maximum(h @ params["fc1_w"].T + params["fc1_b"], 0.0)
    return h @ params["fc2_w"].T + params["fc2_b"]


if __name__ == "__main__":
    key = jax.random.PRNGKey(0)
    pkey, xkey = jax.random.split(key)
    params = init_params(pkey)
    # CIFAR-shaped input (fc1 expects 20*14*14 = 3920 features -> 32x32 input)
    x = jax.random.normal(xkey, (2, 3, 32, 32), dtype=jnp.float32)

    prepped = prepare_params(params)          # one-time weight preparation
    fwd = jax.jit(model_fc_forward)
    out = jax.block_until_ready(fwd(prepped, x))
    ref = jax.block_until_ready(reference_forward(params, x))

    assert out.shape == (2, 10), out.shape
    err = jnp.max(jnp.abs(out - ref))
    # tolerance sized for bf16 MXU operands (accumulation stays f32)
    assert jnp.allclose(out, ref, rtol=5e-3, atol=5e-3), f"max abs diff {err}"
    print("KERNEL_OK")
</pallas_src>

<mosaic_0001>
module attributes {stable_mosaic.version = 11 : i64} {
  func.func @_conv_relu_pool_kernel(%arg0: i32, %arg1: memref<1x4x80x196xbf16, #tpu.memory_space<vmem>>, %arg2: memref<24x80xbf16, #tpu.memory_space<vmem>>, %arg3: memref<24x1xf32, #tpu.memory_space<vmem>>, %arg4: memref<1x24x196xf32, #tpu.memory_space<vmem>>) attributes {dimension_semantics = [#tpu.dimension_semantics<parallel>], iteration_bounds = array<i64: 2>, scalar_prefetch = 0 : i64, scratch_operands = 0 : i64, tpu.core_type = #tpu.core_type<tc>, window_params = [{transform_indices = @transform_0, window_bounds = array<i64: 1, 4, 80, 196>}, {pipeline_mode = #tpu.pipeline_mode<synchronous>, transform_indices = @transform_1, window_bounds = array<i64: 24, 80>}, {pipeline_mode = #tpu.pipeline_mode<synchronous>, transform_indices = @transform_2, window_bounds = array<i64: 24, 1>}, {transform_indices = @transform_3, window_bounds = array<i64: 1, 24, 196>}]} {
    %c0 = arith.constant 0 : index
    %c0_0 = arith.constant 0 : index
    %0 = vector.load %arg2[%c0, %c0_0] : memref<24x80xbf16, #tpu.memory_space<vmem>>, vector<24x80xbf16>
    %c0_1 = arith.constant 0 : index
    %c0_2 = arith.constant 0 : index
    %c0_3 = arith.constant 0 : index
    %c0_4 = arith.constant 0 : index
    %1 = vector.load %arg1[%c0_1, %c0_2, %c0_3, %c0_4] : memref<1x4x80x196xbf16, #tpu.memory_space<vmem>>, vector<1x1x80x196xbf16>
    %2 = vector.shape_cast %1 : vector<1x1x80x196xbf16> to vector<80x196xbf16>
    %cst = arith.constant dense<0.000000e+00> : vector<24x196xf32>
    %3 = tpu.matmul %0, %2, %cst {dimension_numbers = #tpu.dot_dimension_numbers<[1], [0], [0], [1], [0, 0, 1, 1], [], []>} : vector<24x80xbf16>, vector<80x196xbf16>, vector<24x196xf32> -> vector<24x196xf32>
    %c0_5 = arith.constant 0 : index
    %c1 = arith.constant 1 : index
    %c0_6 = arith.constant 0 : index
    %c0_7 = arith.constant 0 : index
    %4 = vector.load %arg1[%c0_5, %c1, %c0_6, %c0_7] : memref<1x4x80x196xbf16, #tpu.memory_space<vmem>>, vector<1x1x80x196xbf16>
    %5 = vector.shape_cast %4 : vector<1x1x80x196xbf16> to vector<80x196xbf16>
    %cst_8 = arith.constant dense<0.000000e+00> : vector<24x196xf32>
    %6 = tpu.matmul %0, %5, %cst_8 {dimension_numbers = #tpu.dot_dimension_numbers<[1], [0], [0], [1], [0, 0, 1, 1], [], []>} : vector<24x80xbf16>, vector<80x196xbf16>, vector<24x196xf32> -> vector<24x196xf32>
    %7 = arith.maximumf %3, %6 : vector<24x196xf32>
    %c0_9 = arith.constant 0 : index
    %c2 = arith.constant 2 : index
    %c0_10 = arith.constant 0 : index
    %c0_11 = arith.constant 0 : index
    %8 = vector.load %arg1[%c0_9, %c2, %c0_10, %c0_11] : memref<1x4x80x196xbf16, #tpu.memory_space<vmem>>, vector<1x1x80x196xbf16>
    %9 = vector.shape_cast %8 : vector<1x1x80x196xbf16> to vector<80x196xbf16>
    %cst_12 = arith.constant dense<0.000000e+00> : vector<24x196xf32>
    %10 = tpu.matmul %0, %9, %cst_12 {dimension_numbers = #tpu.dot_dimension_numbers<[1], [0], [0], [1], [0, 0, 1, 1], [], []>} : vector<24x80xbf16>, vector<80x196xbf16>, vector<24x196xf32> -> vector<24x196xf32>
    %11 = arith.maximumf %7, %10 : vector<24x196xf32>
    %c0_13 = arith.constant 0 : index
    %c3 = arith.constant 3 : index
    %c0_14 = arith.constant 0 : index
    %c0_15 = arith.constant 0 : index
    %12 = vector.load %arg1[%c0_13, %c3, %c0_14, %c0_15] : memref<1x4x80x196xbf16, #tpu.memory_space<vmem>>, vector<1x1x80x196xbf16>
    %13 = vector.shape_cast %12 : vector<1x1x80x196xbf16> to vector<80x196xbf16>
    %cst_16 = arith.constant dense<0.000000e+00> : vector<24x196xf32>
    %14 = tpu.matmul %0, %13, %cst_16 {dimension_numbers = #tpu.dot_dimension_numbers<[1], [0], [0], [1], [0, 0, 1, 1], [], []>} : vector<24x80xbf16>, vector<80x196xbf16>, vector<24x196xf32> -> vector<24x196xf32>
    %15 = arith.maximumf %11, %14 : vector<24x196xf32>
    %c0_17 = arith.constant 0 : index
    %c0_18 = arith.constant 0 : index
    %16 = vector.load %arg3[%c0_17, %c0_18] : memref<24x1xf32, #tpu.memory_space<vmem>>, vector<24x1xf32>
    %17 = vector.broadcast %16 : vector<24x1xf32> to vector<24x196xf32>
    %18 = arith.addf %15, %17 : vector<24x196xf32>
    %cst_19 = arith.constant 0.000000e+00 : f32
    %19 = vector.broadcast %cst_19 : f32 to vector<24x196xf32>
    %20 = arith.maximumf %18, %19 : vector<24x196xf32>
    %c0_20 = arith.constant 0 : index
    %c0_21 = arith.constant 0 : index
    %c0_22 = arith.constant 0 : index
    %21 = vector.load %arg4[%c0_20, %c0_21, %c0_22] : memref<1x24x196xf32, #tpu.memory_space<vmem>>, vector<1x24x196xf32>
    %22 = vector.shape_cast %21 : vector<1x24x196xf32> to vector<24x196xf32>
    %23 = vector.shape_cast %20 : vector<24x196xf32> to vector<1x24x196xf32>
    tpu.vector_store %arg4[%c0_20, %c0_21, %c0_22], %23 {strides = array<i32>} : memref<1x24x196xf32, #tpu.memory_space<vmem>>, vector<1x24x196xf32>,
    return
  }
  func.func @transform_0(%arg0: i32) -> (i32, i32, i32, i32) {
    %c0_i32 = arith.constant 0 : i32
    %c0_i32_0 = arith.constant 0 : i32
    %c0_i32_1 = arith.constant 0 : i32
    %c0_i32_2 = arith.constant 0 : i32
    return %arg0, %c0_i32, %c0_i32_0, %c0_i32_1 : i32, i32, i32, i32
  }
  func.func @transform_1(%arg0: i32) -> (i32, i32) {
    %c0_i32 = arith.constant 0 : i32
    %c0_i32_0 = arith.constant 0 : i32
    %c0_i32_1 = arith.constant 0 : i32
    return %c0_i32, %c0_i32_0 : i32, i32
  }
  func.func @transform_2(%arg0: i32) -> (i32, i32) {
    %c0_i32 = arith.constant 0 : i32
    %c0_i32_0 = arith.constant 0 : i32
    %c0_i32_1 = arith.constant 0 : i32
    return %c0_i32, %c0_i32_0 : i32, i32
  }
  func.func @transform_3(%arg0: i32) -> (i32, i32, i32) {
    %c0_i32 = arith.constant 0 : i32
    %c0_i32_0 = arith.constant 0 : i32
    %c0_i32_1 = arith.constant 0 : i32
    return %arg0, %c0_i32, %c0_i32_0 : i32, i32, i32
  }
}

module attributes {stable_mosaic.version = 11 : i64} {
  func.func @_fc_fused_kernel(%arg0: memref<2x4704xbf16, #tpu.memory_space<vmem>>, %arg1: memref<4704x64xbf16, #tpu.memory_space<vmem>>, %arg2: memref<1x64xf32, #tpu.memory_space<vmem>>, %arg3: memref<64x128xbf16, #tpu.memory_space<vmem>>, %arg4: memref<1x128xf32, #tpu.memory_space<vmem>>, %arg5: memref<2x128xf32, #tpu.memory_space<vmem>>) attributes {dimension_semantics = [], scalar_prefetch = 0 : i64, scratch_operands = 0 : i64, tpu.core_type = #tpu.core_type<tc>} {
    %c0 = arith.constant 0 : index
    %c0_0 = arith.constant 0 : index
    %0 = vector.load %arg0[%c0, %c0_0] : memref<2x4704xbf16, #tpu.memory_space<vmem>>, vector<2x4704xbf16>
    %c0_1 = arith.constant 0 : index
    %c0_2 = arith.constant 0 : index
    %1 = vector.load %arg1[%c0_1, %c0_2] : memref<4704x64xbf16, #tpu.memory_space<vmem>>, vector<4704x64xbf16>
    %cst = arith.constant dense<0.000000e+00> : vector<2x64xf32>
    %2 = tpu.matmul %0, %1, %cst {dimension_numbers = #tpu.dot_dimension_numbers<[1], [0], [0], [1], [0, 0, 1, 1], [], []>} : vector<2x4704xbf16>, vector<4704x64xbf16>, vector<2x64xf32> -> vector<2x64xf32>
    %c0_3 = arith.constant 0 : index
    %c0_4 = arith.constant 0 : index
    %3 = vector.load %arg2[%c0_3, %c0_4] : memref<1x64xf32, #tpu.memory_space<vmem>>, vector<1x64xf32>
    %4 = vector.broadcast %3 : vector<1x64xf32> to vector<2x64xf32>
    %5 = arith.addf %2, %4 : vector<2x64xf32>
    %cst_5 = arith.constant 0.000000e+00 : f32
    %6 = vector.broadcast %cst_5 : f32 to vector<2x64xf32>
    %7 = arith.maximumf %5, %6 : vector<2x64xf32>
    %8 = arith.truncf %7 : vector<2x64xf32> to vector<2x64xbf16>
    %c0_6 = arith.constant 0 : index
    %c0_7 = arith.constant 0 : index
    %9 = vector.load %arg3[%c0_6, %c0_7] : memref<64x128xbf16, #tpu.memory_space<vmem>>, vector<64x128xbf16>
    %cst_8 = arith.constant dense<0.000000e+00> : vector<2x128xf32>
    %10 = tpu.matmul %8, %9, %cst_8 {dimension_numbers = #tpu.dot_dimension_numbers<[1], [0], [0], [1], [0, 0, 1, 1], [], []>} : vector<2x64xbf16>, vector<64x128xbf16>, vector<2x128xf32> -> vector<2x128xf32>
    %c0_9 = arith.constant 0 : index
    %c0_10 = arith.constant 0 : index
    %11 = vector.load %arg4[%c0_9, %c0_10] : memref<1x128xf32, #tpu.memory_space<vmem>>, vector<1x128xf32>
    %12 = vector.broadcast %11 : vector<1x128xf32> to vector<2x128xf32>
    %13 = arith.addf %10, %12 : vector<2x128xf32>
    %c0_11 = arith.constant 0 : index
    %c0_12 = arith.constant 0 : index
    %14 = vector.load %arg5[%c0_11, %c0_12] : memref<2x128xf32, #tpu.memory_space<vmem>>, vector<2x128xf32>
    tpu.vector_store %arg5[%c0_11, %c0_12], %13 {strides = array<i32>} : memref<2x128xf32, #tpu.memory_space<vmem>>, vector<2x128xf32>,
    return
  }
}

</mosaic_0001>

<llo_original>
// kernel: model_fc_forward.2
$region0: #{model_fc_forward.2}
  #allocation0 [shape = 'u32[]', space=smem, size = 0x4, offset = 0x4, fixed_abs, tag = 'smem constant byte address 0x4 - core index']
  #allocation1 [shape = 'u32[72,128]{1,0:T(1,128)}', space=vmem, size = 0x9000, scoped, tag = 'internal scratch']
  %s0 = inlined_call_operand.vmem [shape: bf16[2,4,80,196], index: 0, kind: input, shape index: {}]
  %s1 = inlined_call_operand.vmem [shape: bf16[24,80], index: 1, kind: input, shape index: {}]
  %s2 = inlined_call_operand.vmem [shape: f32[24,1], index: 2, kind: input, shape index: {}]
  %s3 = inlined_call_operand.vmem [shape: f32[2,24,196], index: 3, kind: output, shape index: {}]
  %s4 = sld [smem:[#allocation0]]
  $region45: #{model_fc_forward.2} parent=0
    _
  %s6 = ssub.s32 1, %s4
  %s7 = scalar_select 0, %s6, %s4
  loop: start=0, step=1, limit=4
  $region2: #{model_fc_forward.2} parent=0 // loop_pre_header
    _
  $region3: #{model_fc_forward.2} parent=0 // loop_header
    %s9 = sphi 0, %s13
    %p10 = scmp.ge.s32.totalorder %s9, 4
    %s19 = sphi 0, %s21
    %s22 = sphi 0, %s19
    %s23 = sphi 0, %s22
    %s39 = sphi 0, %s23
    %s43 = sphi 0, %s43
    %s45 = sphi 0, %s43
    %s46 = sphi 0, %s45
    %s60 = sphi 0, %s46
    %s64 = sphi 0, %s64
    %s66 = sphi 0, %s64
    %s67 = sphi 0, %s66
    %s81 = sphi 0, %s67
    %s87 = sphi 0, %s89
    %s90 = sphi 0, %s87
    %s91 = sphi 0, %s90
    %s107 = sphi 0, %s91
  $region4: #{model_fc_forward.2} parent=0 // loop_header_branch
    %12 = sbr.rel (%p10) target = $region8
  $region5: #{model_fc_forward.2} parent=0 // loop_body
    %s14 = ssub.s32 %s9, 1
    %s15 = ssub.s32 %s9, 2
    %s16 = sadd.s32 %s9, 1
    %s17 = ssub.s32 %s9, %s16
    %p18 = scmp.eq.s32.totalorder %s17, 0
    %s20 = sadd.s32 %s19, 1
    %s21 = scalar_select %p18, %s19, %s20
    %p24 = pneg %p18
    %p25 = scmp.eq.s32.totalorder %s9, 1
    %p26 = por %p24, %p25
    %p27 = scmp.ne.s32.totalorder %s19, %s22
    %p28 = scmp.eq.s32.totalorder %s9, 0
    %p29 = por %p27, %p28
    %p30 = scmp.ne.s32.totalorder %s19, %s22
    %p31 = scmp.eq.s32.totalorder %s14, 1
    %p32 = por %p30, %p31
    %p33 = scmp.ne.s32.totalorder %s22, %s23
    %p34 = scmp.eq.s32.totalorder %s14, 0
    %p35 = por %p33, %p34
    %p36 = scmp.ne.s32.totalorder %s22, %s23
    %p37 = scmp.eq.s32.totalorder %s15, 1
    %p38 = por %p36, %p37
    %p40 = scmp.ne.s32.totalorder %s23, %s39
    %p41 = scmp.eq.s32.totalorder %s15, 0
    %p42 = por %p40, %p41
    %s44 = sadd.s32 %s43, 1
    %p47 = scmp.eq.s32.totalorder %s9, 1
    %p48 = scmp.ne.s32.totalorder %s43, %s45
    %p49 = scmp.eq.s32.totalorder %s9, 0
    %p50 = por %p48, %p49
    %p51 = scmp.ne.s32.totalorder %s43, %s45
    %p52 = scmp.eq.s32.totalorder %s14, 1
    %p53 = por %p51, %p52
    %p54 = scmp.ne.s32.totalorder %s45, %s46
    %p55 = scmp.eq.s32.totalorder %s14, 0
    %p56 = por %p54, %p55
    %p57 = scmp.ne.s32.totalorder %s45, %s46
    %p58 = scmp.eq.s32.totalorder %s15, 1
    %p59 = por %p57, %p58
    %p61 = scmp.ne.s32.totalorder %s46, %s60
    %p62 = scmp.eq.s32.totalorder %s15, 0
    %p63 = por %p61, %p62
    %s65 = sadd.s32 %s64, 1
    %p68 = scmp.eq.s32.totalorder %s9, 1
    %p69 = scmp.ne.s32.totalorder %s64, %s66
    %p70 = scmp.eq.s32.totalorder %s9, 0
    %p71 = por %p69, %p70
    %p72 = scmp.ne.s32.totalorder %s64, %s66
    %p73 = scmp.eq.s32.totalorder %s14, 1
    %p74 = por %p72, %p73
    %p75 = scmp.ne.s32.totalorder %s66, %s67
    %p76 = scmp.eq.s32.totalorder %s14, 0
    %p77 = por %p75, %p76
    %p78 = scmp.ne.s32.totalorder %s66, %s67
    %p79 = scmp.eq.s32.totalorder %s15, 1
    %p80 = por %p78, %p79
    %p82 = scmp.ne.s32.totalorder %s67, %s81
    %p83 = scmp.eq.s32.totalorder %s15, 0
    %p84 = por %p82, %p83
    %s85 = ssub.s32 %s9, %s16
    %p86 = scmp.eq.s32.totalorder %s85, 0
    %s88 = sadd.s32 %s87, 1
    %s89 = scalar_select %p86, %s87, %s88
    %p92 = pneg %p86
    %p93 = scmp.eq.s32.totalorder %s9, 1
    %p94 = por %p92, %p93
    %p95 = scmp.ne.s32.totalorder %s87, %s90
    %p96 = scmp.eq.s32.totalorder %s9, 0
    %p97 = por %p95, %p96
    %p98 = scmp.ne.s32.totalorder %s87, %s90
    %p99 = scmp.eq.s32.totalorder %s14, 1
    %p100 = por %p98, %p99
    %p101 = scmp.ne.s32.totalorder %s90, %s91
    %p102 = scmp.eq.s32.totalorder %s14, 0
    %p103 = por %p101, %p102
    %p104 = scmp.ne.s32.totalorder %s90, %s91
    %p105 = scmp.eq.s32.totalorder %s15, 1
    %p106 = por %p104, %p105
    %p108 = scmp.ne.s32.totalorder %s91, %s107
    %p109 = scmp.eq.s32.totalorder %s15, 0
    %p110 = por %p108, %p109
    %p111 = scmp.le.s32.totalorder 1, %s9
    %p112 = scmp.lt.s32.totalorder %s9, 3
    %p113 = pnand %p111, %p112
    %p114 = pneg %p113
    // Predicated region
    $region9: #{model_fc_forward.2} parent=5 // pred_check
      _
    $region10: #{model_fc_forward.2} parent=5 // pred_check_branch
      %116 = sbr.rel (%p113) target = $region12
    $region11: #{model_fc_forward.2} parent=5 // pred_region
      %s117 = ssub.s32 %s9, 1
      // Predicated region
      $region13: #{model_fc_forward.2} parent=11 // pred_check
        %p118 = pneg %p56
      $region14: #{model_fc_forward.2} parent=11 // pred_check_branch
        %120 = sbr.rel (%p118) target = $region16
      $region15: #{model_fc_forward.2} parent=11 // pred_region
        _
      $region16: #{model_fc_forward.2} parent=11 // pred_fallthru
        _
      // Predicated region
      $region17: #{model_fc_forward.2} parent=11 // pred_check
        %p121 = pneg %p77
      $region18: #{model_fc_forward.2} parent=11 // pred_check_branch
        %123 = sbr.rel (%p121) target = $region20
      $region19: #{model_fc_forward.2} parent=11 // pred_region
        _
      $region20: #{model_fc_forward.2} parent=11 // pred_fallthru
        _
    $region12: #{model_fc_forward.2} parent=5 // pred_fallthru
      _
    %p124 = scmp.lt.s32.totalorder %s9, 2
    // Predicated region
    $region21: #{model_fc_forward.2} parent=5 // pred_check
      %p125 = pneg %p124
    $region22: #{model_fc_forward.2} parent=5 // pred_check_branch
      %127 = sbr.rel (%p125) target = $region24
    $region23: #{model_fc_forward.2} parent=5 // pred_region
      // Predicated region
      $region25: #{model_fc_forward.2} parent=23 // pred_check
        %p128 = pneg %p29
      $region26: #{model_fc_forward.2} parent=23 // pred_check_branch
        %130 = sbr.rel (%p128) target = $region28
      $region27: #{model_fc_forward.2} parent=23 // pred_region
        %p131 = scmp.lt.s32.totalorder %s9, 1
        %s132 = scalar_select %p131, %s9, 1
        %s133 = smul.addr %s132, 80
        %s134 = smul.addr %s133, 4
        %s135 = scalar_lea.vmem %s0, %s134
      $region28: #{model_fc_forward.2} parent=23 // pred_fallthru
        _
    $region24: #{model_fc_forward.2} parent=5 // pred_fallthru
      _
    %p136 = scmp.le.s32.totalorder 1, %s9
    %p137 = scmp.lt.s32.totalorder %s9, 3
    %p138 = pnand %p136, %p137
    %p139 = pneg %p138
    // Predicated region
    $region29: #{model_fc_forward.2} parent=5 // pred_check
      _
    $region30: #{model_fc_forward.2} parent=5 // pred_check_branch
      %141 = sbr.rel (%p138) target = $region32
    $region31: #{model_fc_forward.2} parent=5 // pred_region
      %s142 = ssub.s32 %s9, 1
      %p143 = scmp.lt.s32.totalorder %s14, 1
      %s144 = scalar_select %p143, %s14, 1
      %s145 = smul.addr %s144, 80
      %s146 = smul.addr %s145, 4
      %s147 = scalar_lea.vmem %s0, %s146
      %p148 = pneg %p35
      %p149 = pneg %p32
      %p150 = pneg %p56
      %p151 = pneg %p53
      %p152 = pneg %p77
      %p153 = pneg %p74
      %p154 = pneg %p103
      %p155 = pneg %p100
      %p156 = scmp.lt.s32.totalorder %s14, 1
      %s157 = scalar_select %p156, %s14, 1
      %s158 = smul.addr %s157, 6
      %s159 = smul.addr %s158, 8
      %s160 = scalar_lea.vmem %s3, %s159
      %p161 = scmp.lt.s32.totalorder %s14, 1
      %s162 = scalar_select %p161, %s14, 1
      %s163 = smul.addr %s162, 80
      %s164 = smul.addr %s163, 4
      %s165 = scalar_lea.vmem %s0, %s164
      %p166 = scmp.lt.s32.totalorder %s14, 1
      %s167 = scalar_select %p166, %s14, 1
      %s168 = smul.addr %s167, 6
      %s169 = smul.addr %s168, 8
      %s170 = scalar_lea.vmem %s3, %s169
      %v172 = vld [vmem:[%s1] sm:$0xf]
      %v173 = vld [vmem:[%s1 + $0x4] sm:$0xf]
      %v174 = vld [vmem:[%s1 + $0x8] sm:$0xf]
      %v175 = vld [vmem:[%s165] sm:$0xff]
      %v176 = vld [vmem:[%s165 + $0x8] sm:$0xff]
      %v177 = vld [vmem:[%s165 + $0x10] sm:$0xff]
      %v178 = vld [vmem:[%s165 + $0x18] sm:$0xff]
      %v179 = vld [vmem:[%s165 + $0x20] sm:$0xff]
      %v180 = vld [vmem:[%s165 + $0x28] sm:$0xff]
      %v181 = vld [vmem:[%s165 + $0x30] sm:$0xff]
      %v182 = vld [vmem:[%s165 + $0x38] sm:$0xff]
      %v183 = vld [vmem:[%s165 + $0x40] sm:$0xff]
      %v184 = vld [vmem:[%s165 + $0x48] sm:$0xff]
      %v188 = vunpack.c.l.b16 %v172
      %v189 = vunpack.c.l.b16 %v173
      %v190 = vunpack.c.l.b16 %v174
      %v191 = vpack.c.b16 %v189, %v188
      %v192 = vpack.c.b16 %v190, %v190
      %v203 = vunpack.c.l.b16 %v175
      %v204 = vunpack.c.h.b16 %v175
      %v205 = vunpack.c.l.b16 %v176
      %v206 = vunpack.c.h.b16 %v176
      %v207 = vunpack.c.l.b16 %v177
      %v208 = vunpack.c.h.b16 %v177
      %v209 = vunpack.c.l.b16 %v178
      %v210 = vunpack.c.h.b16 %v178
      %v211 = vunpack.c.l.b16 %v179
      %v212 = vunpack.c.h.b16 %v179
      %v213 = vunpack.c.l.b16 %v180
      %v214 = vunpack.c.h.b16 %v180
      %v215 = vunpack.c.l.b16 %v181
      %v216 = vunpack.c.h.b16 %v181
      %v217 = vunpack.c.l.b16 %v182
      %v218 = vunpack.c.h.b16 %v182
      %v219 = vunpack.c.l.b16 %v183
      %v220 = vunpack.c.h.b16 %v183
      %v221 = vunpack.c.l.b16 %v184
      %v222 = vunpack.c.h.b16 %v184
      %v223 = vpack.c.b16 %v205, %v203
      %v224 = vpack.c.b16 %v206, %v204
      %v225 = vpack.c.b16 %v209, %v207
      %v226 = vpack.c.b16 %v210, %v208
      %v227 = vpack.c.b16 %v213, %v211
      %v228 = vpack.c.b16 %v214, %v212
      %v229 = vpack.c.b16 %v217, %v215
      %v230 = vpack.c.b16 %v218, %v216
      %v231 = vpack.c.b16 %v221, %v219
      %v232 = vpack.c.b16 %v222, %v220
      %vm243 = vcmask 654336
      %v245 = vsel %vm243, %v191, 0
      %v248 = vsel %vm243, %v192, 0
      %250 = vmatpush.bf16.msra.mxu0 0
      %251 = vmatpush.bf16.msra.mxu0 0
      %252 = vmatpush.bf16.msra.mxu0 0
      %253 = vmatpush.bf16.msra.mxu0 %v231
      %254 = vmatpush.bf16.msra.mxu0 %v229
      %255 = vmatpush.bf16.msra.mxu0 %v227
      %256 = vmatpush.bf16.msra.mxu0 %v225
      %257 = vmatpush.bf16.msra.mxu0 %v223
      %258 = vmatmul.bf16.gmra.mxu0 %v245
      %v259 = vpop.f32.mrf.mxu0
      %v260 = vadd.f32 0.0, %v259
      %v261 = vpop.f32.mrf.mxu0
      %v262 = vadd.f32 0.0, %v261
      %263 = vmatmul.bf16.gmra.mxu0 %v248
      %v264 = vpop.f32.mrf.mxu0
      %v265 = vadd.f32 0.0, %v264
      %v266 = vpop.f32.mrf.mxu0
      %267 = vdwg.mxu0
      %268 = vmatpush.bf16.msra.mxu0 0
      %269 = vmatpush.bf16.msra.mxu0 0
      %270 = vmatpush.bf16.msra.mxu0 0
      %271 = vmatpush.bf16.msra.mxu0 %v232
      %272 = vmatpush.bf16.msra.mxu0 %v230
      %273 = vmatpush.bf16.msra.mxu0 %v228
      %274 = vmatpush.bf16.msra.mxu0 %v226
      %275 = vmatpush.bf16.msra.mxu0 %v224
      %276 = vmatmul.bf16.gmra.mxu0 %v245
      %v277 = vpop.f32.mrf.mxu0
      %v278 = vadd.f32 0.0, %v277
      %v279 = vpop.f32.mrf.mxu0
      %v280 = vadd.f32 0.0, %v279
      %281 = vmatmul.bf16.gmra.mxu0 %v248
      %v282 = vpop.f32.mrf.mxu0
      %v283 = vadd.f32 0.0, %v282
      %v284 = vpop.f32.mrf.mxu0
      %285 = vdwg.mxu0
      %s286 = scalar_lea.vmem %s165, 80
      %v287 = vld [vmem:[%s286] sm:$0xff]
      %v288 = vld [vmem:[%s286 + $0x8] sm:$0xff]
      %v289 = vld [vmem:[%s286 + $0x10] sm:$0xff]
      %v290 = vld [vmem:[%s286 + $0x18] sm:$0xff]
      %v291 = vld [vmem:[%s286 + $0x20] sm:$0xff]
      %v292 = vld [vmem:[%s286 + $0x28] sm:$0xff]
      %v293 = vld [vmem:[%s286 + $0x30] sm:$0xff]
      %v294 = vld [vmem:[%s286 + $0x38] sm:$0xff]
      %v295 = vld [vmem:[%s286 + $0x40] sm:$0xff]
      %v296 = vld [vmem:[%s286 + $0x48] sm:$0xff]
      %v307 = vunpack.c.l.b16 %v287
      %v308 = vunpack.c.h.b16 %v287
      %v309 = vunpack.c.l.b16 %v288
      %v310 = vunpack.c.h.b16 %v288
      %v311 = vunpack.c.l.b16 %v289
      %v312 = vunpack.c.h.b16 %v289
      %v313 = vunpack.c.l.b16 %v290
      %v314 = vunpack.c.h.b16 %v290
      %v315 = vunpack.c.l.b16 %v291
      %v316 = vunpack.c.h.b16 %v291
      %v317 = vunpack.c.l.b16 %v292
      %v318 = vunpack.c.h.b16 %v292
      %v319 = vunpack.c.l.b16 %v293
      %v320 = vunpack.c.h.b16 %v293
      %v321 = vunpack.c.l.b16 %v294
      %v322 = vunpack.c.h.b16 %v294
      %v323 = vunpack.c.l.b16 %v295
      %v324 = vunpack.c.h.b16 %v295
      %v325 = vunpack.c.l.b16 %v296
      %v326 = vunpack.c.h.b16 %v296
      %v327 = vpack.c.b16 %v309, %v307
      %v328 = vpack.c.b16 %v310, %v308
      %v329 = vpack.c.b16 %v313, %v311
      %v330 = vpack.c.b16 %v314, %v312
      %v331 = vpack.c.b16 %v317, %v315
      %v332 = vpack.c.b16 %v318, %v316
      %v333 = vpack.c.b16 %v321, %v319
      %v334 = vpack.c.b16 %v322, %v320
      %v335 = vpack.c.b16 %v325, %v323
      %v336 = vpack.c.b16 %v326, %v324
      %347 = vmatpush.bf16.msra.mxu0 0
      %348 = vmatpush.bf16.msra.mxu0 0
      %349 = vmatpush.bf16.msra.mxu0 0
      %350 = vmatpush.bf16.msra.mxu0 %v335
      %351 = vmatpush.bf16.msra.mxu0 %v333
      %352 = vmatpush.bf16.msra.mxu0 %v331
      %353 = vmatpush.bf16.msra.mxu0 %v329
      %354 = vmatpush.bf16.msra.mxu0 %v327
      %355 = vmatmul.bf16.gmra.mxu0 %v245
      %v356 = vpop.f32.mrf.mxu0
      %v357 = vadd.f32 0.0, %v356
      %v358 = vpop.f32.mrf.mxu0
      %v359 = vadd.f32 0.0, %v358
      %360 = vmatmul.bf16.gmra.mxu0 %v248
      %v361 = vpop.f32.mrf.mxu0
      %v362 = vadd.f32 0.0, %v361
      %v363 = vpop.f32.mrf.mxu0
      %364 = vdwg.mxu0
      %365 = vmatpush.bf16.msra.mxu0 0
      %366 = vmatpush.bf16.msra.mxu0 0
      %367 = vmatpush.bf16.msra.mxu0 0
      %368 = vmatpush.bf16.msra.mxu0 %v336
      %369 = vmatpush.bf16.msra.mxu0 %v334
      %370 = vmatpush.bf16.msra.mxu0 %v332
      %371 = vmatpush.bf16.msra.mxu0 %v330
      %372 = vmatpush.bf16.msra.mxu0 %v328
      %373 = vmatmul.bf16.gmra.mxu0 %v245
      %v374 = vpop.f32.mrf.mxu0
      %v375 = vadd.f32 0.0, %v374
      %v376 = vpop.f32.mrf.mxu0
      %v377 = vadd.f32 0.0, %v376
      %378 = vmatmul.bf16.gmra.mxu0 %v248
      %v379 = vpop.f32.mrf.mxu0
      %v380 = vadd.f32 0.0, %v379
      %v381 = vpop.f32.mrf.mxu0
      %382 = vdwg.mxu0
      %v383 = vmax.f32 %v260, %v357
      %v384 = vmax.f32 %v278, %v375
      %v385 = vmax.f32 %v262, %v359
      %v386 = vmax.f32 %v280, %v377
      %v387 = vmax.f32 %v265, %v362
      %v388 = vmax.f32 %v283, %v380
      %s389 = scalar_lea.vmem %s165, 160
      %v390 = vld [vmem:[%s389] sm:$0xff]
      %v391 = vld [vmem:[%s389 + $0x8] sm:$0xff]
      %v392 = vld [vmem:[%s389 + $0x10] sm:$0xff]
      %v393 = vld [vmem:[%s389 + $0x18] sm:$0xff]
      %v394 = vld [vmem:[%s389 + $0x20] sm:$0xff]
      %v395 = vld [vmem:[%s389 + $0x28] sm:$0xff]
      %v396 = vld [vmem:[%s389 + $0x30] sm:$0xff]
      %v397 = vld [vmem:[%s389 + $0x38] sm:$0xff]
      %v398 = vld [vmem:[%s389 + $0x40] sm:$0xff]
      %v399 = vld [vmem:[%s389 + $0x48] sm:$0xff]
      %v410 = vunpack.c.l.b16 %v390
      %v411 = vunpack.c.h.b16 %v390
      %v412 = vunpack.c.l.b16 %v391
      %v413 = vunpack.c.h.b16 %v391
      %v414 = vunpack.c.l.b16 %v392
      %v415 = vunpack.c.h.b16 %v392
      %v416 = vunpack.c.l.b16 %v393
      %v417 = vunpack.c.h.b16 %v393
      %v418 = vunpack.c.l.b16 %v394
      %v419 = vunpack.c.h.b16 %v394
      %v420 = vunpack.c.l.b16 %v395
      %v421 = vunpack.c.h.b16 %v395
      %v422 = vunpack.c.l.b16 %v396
      %v423 = vunpack.c.h.b16 %v396
      %v424 = vunpack.c.l.b16 %v397
      %v425 = vunpack.c.h.b16 %v397
      %v426 = vunpack.c.l.b16 %v398
      %v427 = vunpack.c.h.b16 %v398
      %v428 = vunpack.c.l.b16 %v399
      %v429 = vunpack.c.h.b16 %v399
      %v430 = vpack.c.b16 %v412, %v410
      %v431 = vpack.c.b16 %v413, %v411
      %v432 = vpack.c.b16 %v416, %v414
      %v433 = vpack.c.b16 %v417, %v415
      %v434 = vpack.c.b16 %v420, %v418
      %v435 = vpack.c.b16 %v421, %v419
      %v436 = vpack.c.b16 %v424, %v422
      %v437 = vpack.c.b16 %v425, %v423
      %v438 = vpack.c.b16 %v428, %v426
      %v439 = vpack.c.b16 %v429, %v427
      %450 = vmatpush.bf16.msra.mxu0 0
      %451 = vmatpush.bf16.msra.mxu0 0
      %452 = vmatpush.bf16.msra.mxu0 0
      %453 = vmatpush.bf16.msra.mxu0 %v438
      %454 = vmatpush.bf16.msra.mxu0 %v436
      %455 = vmatpush.bf16.msra.mxu0 %v434
      %456 = vmatpush.bf16.msra.mxu0 %v432
      %457 = vmatpush.bf16.msra.mxu0 %v430
      %458 = vmatmul.bf16.gmra.mxu0 %v245
      %v459 = vpop.f32.mrf.mxu0
      %v460 = vadd.f32 0.0, %v459
      %v461 = vpop.f32.mrf.mxu0
      %v462 = vadd.f32 0.0, %v461
      %463 = vmatmul.bf16.gmra.mxu0 %v248
      %v464 = vpop.f32.mrf.mxu0
      %v465 = vadd.f32 0.0, %v464
      %v466 = vpop.f32.mrf.mxu0
      %467 = vdwg.mxu0
      %468 = vmatpush.bf16.msra.mxu0 0
      %469 = vmatpush.bf16.msra.mxu0 0
      %470 = vmatpush.bf16.msra.mxu0 0
      %471 = vmatpush.bf16.msra.mxu0 %v439
      %472 = vmatpush.bf16.msra.mxu0 %v437
      %473 = vmatpush.bf16.msra.mxu0 %v435
      %474 = vmatpush.bf16.msra.mxu0 %v433
      %475 = vmatpush.bf16.msra.mxu0 %v431
      %476 = vmatmul.bf16.gmra.mxu0 %v245
      %v477 = vpop.f32.mrf.mxu0
      %v478 = vadd.f32 0.0, %v477
      %v479 = vpop.f32.mrf.mxu0
      %v480 = vadd.f32 0.0, %v479
      %481 = vmatmul.bf16.gmra.mxu0 %v248
      %v482 = vpop.f32.mrf.mxu0
      %v483 = vadd.f32 0.0, %v482
      %v484 = vpop.f32.mrf.mxu0
      %485 = vdwg.mxu0
      %v486 = vmax.f32 %v383, %v460
      %v487 = vmax.f32 %v384, %v478
      %v488 = vmax.f32 %v385, %v462
      %v489 = vmax.f32 %v386, %v480
      %v490 = vmax.f32 %v387, %v465
      %v491 = vmax.f32 %v388, %v483
      %s492 = scalar_lea.vmem %s165, 240
      %v493 = vld [vmem:[%s492] sm:$0xff]
      %v494 = vld [vmem:[%s492 + $0x8] sm:$0xff]
      %v495 = vld [vmem:[%s492 + $0x10] sm:$0xff]
      %v496 = vld [vmem:[%s492 + $0x18] sm:$0xff]
      %v497 = vld [vmem:[%s492 + $0x20] sm:$0xff]
      %v498 = vld [vmem:[%s492 + $0x28] sm:$0xff]
      %v499 = vld [vmem:[%s492 + $0x30] sm:$0xff]
      %v500 = vld [vmem:[%s492 + $0x38] sm:$0xff]
      %v501 = vld [vmem:[%s492 + $0x40] sm:$0xff]
      %v502 = vld [vmem:[%s492 + $0x48] sm:$0xff]
      %v513 = vunpack.c.l.b16 %v493
      %v514 = vunpack.c.h.b16 %v493
      %v515 = vunpack.c.l.b16 %v494
      %v516 = vunpack.c.h.b16 %v494
      %v517 = vunpack.c.l.b16 %v495
      %v518 = vunpack.c.h.b16 %v495
      %v519 = vunpack.c.l.b16 %v496
      %v520 = vunpack.c.h.b16 %v496
      %v521 = vunpack.c.l.b16 %v497
      %v522 = vunpack.c.h.b16 %v497
      %v523 = vunpack.c.l.b16 %v498
      %v524 = vunpack.c.h.b16 %v498
      %v525 = vunpack.c.l.b16 %v499
      %v526 = vunpack.c.h.b16 %v499
      %v527 = vunpack.c.l.b16 %v500
      %v528 = vunpack.c.h.b16 %v500
      %v529 = vunpack.c.l.b16 %v501
      %v530 = vunpack.c.h.b16 %v501
      %v531 = vunpack.c.l.b16 %v502
      %v532 = vunpack.c.h.b16 %v502
      %v533 = vpack.c.b16 %v515, %v513
      %v534 = vpack.c.b16 %v516, %v514
      %v535 = vpack.c.b16 %v519, %v517
      %v536 = vpack.c.b16 %v520, %v518
      %v537 = vpack.c.b16 %v523, %v521
      %v538 = vpack.c.b16 %v524, %v522
      %v539 = vpack.c.b16 %v527, %v525
      %v540 = vpack.c.b16 %v528, %v526
      %v541 = vpack.c.b16 %v531, %v529
      %v542 = vpack.c.b16 %v532, %v530
      %553 = vmatpush.bf16.msra.mxu0 0
      %554 = vmatpush.bf16.msra.mxu0 0
      %555 = vmatpush.bf16.msra.mxu0 0
      %556 = vmatpush.bf16.msra.mxu0 %v541
      %557 = vmatpush.bf16.msra.mxu0 %v539
      %558 = vmatpush.bf16.msra.mxu0 %v537
      %559 = vmatpush.bf16.msra.mxu0 %v535
      %560 = vmatpush.bf16.msra.mxu0 %v533
      %561 = vmatmul.bf16.gmra.mxu0 %v245
      %v562 = vpop.f32.mrf.mxu0
      %v563 = vadd.f32 0.0, %v562
      %v564 = vpop.f32.mrf.mxu0
      %v565 = vadd.f32 0.0, %v564
      %566 = vmatmul.bf16.gmra.mxu0 %v248
      %v567 = vpop.f32.mrf.mxu0
      %v568 = vadd.f32 0.0, %v567
      %v569 = vpop.f32.mrf.mxu0
      %570 = vdwg.mxu0
      %571 = vmatpush.bf16.msra.mxu0 0
      %572 = vmatpush.bf16.msra.mxu0 0
      %573 = vmatpush.bf16.msra.mxu0 0
      %574 = vmatpush.bf16.msra.mxu0 %v542
      %575 = vmatpush.bf16.msra.mxu0 %v540
      %576 = vmatpush.bf16.msra.mxu0 %v538
      %577 = vmatpush.bf16.msra.mxu0 %v536
      %578 = vmatpush.bf16.msra.mxu0 %v534
      %579 = vmatmul.bf16.gmra.mxu0 %v245
      %v580 = vpop.f32.mrf.mxu0
      %v581 = vadd.f32 0.0, %v580
      %v582 = vpop.f32.mrf.mxu0
      %v583 = vadd.f32 0.0, %v582
      %584 = vmatmul.bf16.gmra.mxu0 %v248
      %v585 = vpop.f32.mrf.mxu0
      %v586 = vadd.f32 0.0, %v585
      %v587 = vpop.f32.mrf.mxu0
      %588 = vdwg.mxu0
      %v589 = vmax.f32 %v486, %v563
      %v590 = vmax.f32 %v487, %v581
      %v591 = vmax.f32 %v488, %v565
      %v592 = vmax.f32 %v489, %v583
      %v593 = vmax.f32 %v490, %v568
      %v594 = vmax.f32 %v491, %v586
      %v595 = vld [vmem:[%s2] sm:$0xff]
      %v596 = vld [vmem:[%s2 + $0x8] sm:$0xff]
      %v597 = vld [vmem:[%s2 + $0x10] sm:$0xff]
      %599 = vset.pattern.permute.xlu0 0
      %600 = vperm.xlu0 %599, %v595
      %v601 = vpop.permute.xlu0 %600
      %604 = vset.pattern.permute.xlu0 0
      %605 = vperm.xlu0 %604, %v596
      %v606 = vpop.permute.xlu0 %605
      %609 = vset.pattern.permute.xlu0 0
      %610 = vperm.xlu0 %609, %v597
      %v611 = vpop.permute.xlu0 %610
      %v613 = vadd.f32 %v589, %v601
      %v614 = vadd.f32 %v590, %v601
      %v615 = vadd.f32 %v591, %v606
      %v616 = vadd.f32 %v592, %v606
      %v617 = vadd.f32 %v593, %v611
      %v618 = vadd.f32 %v594, %v611
      %v619 = vmax.f32 %v613, 0.0
      %v620 = vmax.f32 %v614, 0.0
      %v621 = vmax.f32 %v615, 0.0
      %v622 = vmax.f32 %v616, 0.0
      %v623 = vmax.f32 %v617, 0.0
      %v624 = vmax.f32 %v618, 0.0
      %625 = vst [vmem:[%s170] sm:$0xff] %v619
      %vm626 = vcmask 556032
      %627 = vst.msk [vmem:[%s170 + $0x8] sm:$0xff] %vm626, %v620
      %628 = vst [vmem:[%s170 + $0x10] sm:$0xff] %v621
      %629 = vst.msk [vmem:[%s170 + $0x18] sm:$0xff] %vm626, %v622
      %630 = vst [vmem:[%s170 + $0x20] sm:$0xff] %v623
      %631 = vst.msk [vmem:[%s170 + $0x28] sm:$0xff] %vm626, %v624
      %p632 = scmp.lt.s32.totalorder %s14, 1
      %s633 = scalar_select %p632, %s14, 1
      %s634 = smul.addr %s633, 6
      %s635 = smul.addr %s634, 8
      %s636 = scalar_lea.vmem %s3, %s635
      // Predicated region
      $region33: #{model_fc_forward.2} parent=31 // pred_check
        %p637 = pneg %p100
      $region34: #{model_fc_forward.2} parent=31 // pred_check_branch
        %639 = sbr.rel (%p637) target = $region36
      $region35: #{model_fc_forward.2} parent=31 // pred_region
        _
      $region36: #{model_fc_forward.2} parent=31 // pred_fallthru
        _
    $region32: #{model_fc_forward.2} parent=5 // pred_fallthru
      _
    %p640 = scmp.le.s32.totalorder 2, %s9
    // Predicated region
    $region37: #{model_fc_forward.2} parent=5 // pred_check
      %p641 = pneg %p640
    $region38: #{model_fc_forward.2} parent=5 // pred_check_branch
      %643 = sbr.rel (%p641) target = $region40
    $region39: #{model_fc_forward.2} parent=5 // pred_region
      %s644 = ssub.s32 %s9, 2
      // Predicated region
      $region41: #{model_fc_forward.2} parent=39 // pred_check
        %p645 = pneg %p106
      $region42: #{model_fc_forward.2} parent=39 // pred_check_branch
        %647 = sbr.rel (%p645) target = $region44
      $region43: #{model_fc_forward.2} parent=39 // pred_region
        %p648 = scmp.lt.s32.totalorder %s15, 1
        %s649 = scalar_select %p648, %s15, 1
        %s650 = smul.addr %s649, 6
        %s651 = smul.addr %s650, 8
        %s652 = scalar_lea.vmem %s3, %s651
      $region44: #{model_fc_forward.2} parent=39 // pred_fallthru
        _
    $region40: #{model_fc_forward.2} parent=5 // pred_fallthru
      _
  $region6: #{model_fc_forward.2} parent=0 // loop_footer
    %s13 = sadd.s32 1, %s9
  $region7: #{model_fc_forward.2} parent=0 // loop_footer_branch
    %8 = sbr.rel target = $region3
  $region8: #{model_fc_forward.2} parent=0 // loop_exit
    _

// kernel: model_fc_forward.3
$region0: #{model_fc_forward.3}
  #allocation0 [shape = 'u32[]', space=smem, size = 0x4, offset = 0x4, fixed_abs, tag = 'smem constant byte address 0x4 - core index']
  #allocation1 [shape = 'u32[72,128]{1,0:T(1,128)}', space=vmem, size = 0x9000, scoped, tag = 'internal scratch']
  %s0 = inlined_call_operand.vmem [shape: bf16[2,4704], index: 0, kind: input, shape index: {}]
  %s1 = inlined_call_operand.vmem [shape: bf16[4704,64], index: 1, kind: input, shape index: {}]
  %s2 = inlined_call_operand.vmem [shape: f32[1,64], index: 2, kind: input, shape index: {}]
  %s3 = inlined_call_operand.vmem [shape: bf16[64,128], index: 3, kind: input, shape index: {}]
  %s4 = inlined_call_operand.vmem [shape: f32[1,128], index: 4, kind: input, shape index: {}]
  %s5 = inlined_call_operand.hbm [shape: f32[2,128], index: 5, kind: output, shape index: {}]
  %s6 = sld [smem:[#allocation0]]
  $region30: #{model_fc_forward.3} parent=0
    _
  %s8 = ssub.s32 1, %s6
  %s9 = scalar_select 0, %s8, %s6
  $region1: #{model_fc_forward.3} parent=0
    #allocation2 [shape = 'u8[1024]{0}', space=vmem, size = 0x400, scoped, tag = 'output window, operand 0, single buffered']
    #allocation3 [shape = 's32[1]{0}', space=sflag, size = 0x4, scoped, tag = 'scoped memory for model_fc_forward.3']
    %10 = vsyncpa [#allocation3], 0
    // Predicated region
    $region2: #{model_fc_forward.3} parent=1 // pred_check
      _
    $region3: #{model_fc_forward.3} parent=1 // pred_check_branch
      %12 = sbr.rel (0) target = $region5
    $region4: #{model_fc_forward.3} parent=1 // pred_region
      _
    $region5: #{model_fc_forward.3} parent=1 // pred_fallthru
      _
    // Predicated region
    $region6: #{model_fc_forward.3} parent=1 // pred_check
      _
    $region7: #{model_fc_forward.3} parent=1 // pred_check_branch
      %14 = sbr.rel (0) target = $region9
    $region8: #{model_fc_forward.3} parent=1 // pred_region
      _
    $region9: #{model_fc_forward.3} parent=1 // pred_fallthru
      _
    // Predicated region
    $region10: #{model_fc_forward.3} parent=1 // pred_check
      _
    $region11: #{model_fc_forward.3} parent=1 // pred_check_branch
      %16 = sbr.rel (0) target = $region13
    $region12: #{model_fc_forward.3} parent=1 // pred_region
      _
    $region13: #{model_fc_forward.3} parent=1 // pred_fallthru
      _
    // Predicated region
    $region14: #{model_fc_forward.3} parent=1 // pred_check
      _
    $region15: #{model_fc_forward.3} parent=1 // pred_check_branch
      %18 = sbr.rel (0) target = $region17
    $region16: #{model_fc_forward.3} parent=1 // pred_region
      _
    $region17: #{model_fc_forward.3} parent=1 // pred_fallthru
      _
    // Predicated region
    $region18: #{model_fc_forward.3} parent=1 // pred_check
      _
    $region19: #{model_fc_forward.3} parent=1 // pred_check_branch
      %20 = sbr.rel (0) target = $region21
    $region20: #{model_fc_forward.3} parent=1 // pred_region
      _
    $region21: #{model_fc_forward.3} parent=1 // pred_fallthru
      _
    %v22 = vld [vmem:[%s0] sm:$0xff]
    %v23 = vld [vmem:[%s0 + $0x8] sm:$0xff]
    %v24 = vld [vmem:[%s0 + $0x10] sm:$0xff]
    %v25 = vld [vmem:[%s0 + $0x18] sm:$0xff]
    %v26 = vld [vmem:[%s0 + $0x20] sm:$0x1f]
    %v27 = vld [vmem:[%s1] sm:$0xf]
    %v28 = vld [vmem:[%s1 + $0x4] sm:$0xf]
    %v29 = vld [vmem:[%s1 + $0x8] sm:$0xf]
    %v30 = vld [vmem:[%s1 + $0xc] sm:$0xf]
    %v31 = vld [vmem:[%s1 + $0x10] sm:$0xf]
    %v32 = vld [vmem:[%s1 + $0x14] sm:$0xf]
    %v33 = vld [vmem:[%s1 + $0x18] sm:$0xf]
    %v34 = vld [vmem:[%s1 + $0x1c] sm:$0xf]
    %v35 = vld [vmem:[%s1 + $0x20] sm:$0xf]
    %v36 = vld [vmem:[%s1 + $0x24] sm:$0xf]
    %v37 = vld [vmem:[%s1 + $0x28] sm:$0xf]
    %v38 = vld [vmem:[%s1 + $0x2c] sm:$0xf]
    %v39 = vld [vmem:[%s1 + $0x30] sm:$0xf]
    %v40 = vld [vmem:[%s1 + $0x34] sm:$0xf]
    %v41 = vld [vmem:[%s1 + $0x38] sm:$0xf]
    %v42 = vld [vmem:[%s1 + $0x3c] sm:$0xf]
    %v43 = vld [vmem:[%s1 + $0x40] sm:$0xf]
    %v44 = vld [vmem:[%s1 + $0x44] sm:$0xf]
    %v45 = vld [vmem:[%s1 + $0x48] sm:$0xf]
    %v46 = vld [vmem:[%s1 + $0x4c] sm:$0xf]
    %v47 = vld [vmem:[%s1 + $0x50] sm:$0xf]
    %v48 = vld [vmem:[%s1 + $0x54] sm:$0xf]
    %v49 = vld [vmem:[%s1 + $0x58] sm:$0xf]
    %v50 = vld [vmem:[%s1 + $0x5c] sm:$0xf]
    %v51 = vld [vmem:[%s1 + $0x60] sm:$0xf]
    %v52 = vld [vmem:[%s1 + $0x64] sm:$0xf]
    %v53 = vld [vmem:[%s1 + $0x68] sm:$0xf]
    %v54 = vld [vmem:[%s1 + $0x6c] sm:$0xf]
    %v55 = vld [vmem:[%s1 + $0x70] sm:$0xf]
    %v56 = vld [vmem:[%s1 + $0x74] sm:$0xf]
    %v57 = vld [vmem:[%s1 + $0x78] sm:$0xf]
    %v58 = vld [vmem:[%s1 + $0x7c] sm:$0xf]
    %v59 = vld [vmem:[%s1 + $0x80] sm:$0xf]
    %v60 = vld [vmem:[%s1 + $0x84] sm:$0xf]
    %v61 = vld [vmem:[%s1 + $0x88] sm:$0xf]
    %v62 = vld [vmem:[%s1 + $0x8c] sm:$0xf]
    %v63 = vld [vmem:[%s1 + $0x90] sm:$0xf]
    %v64 = vld [vmem:[%s1 + $0x94] sm:$0xf]
    %v65 = vld [vmem:[%s1 + $0x98] sm:$0xf]
    %v66 = vld [vmem:[%s1 + $0x9c] sm:$0xf]
    %v67 = vld [vmem:[%s1 + $0xa0] sm:$0xf]
    %v68 = vld [vmem:[%s1 + $0xa4] sm:$0xf]
    %v69 = vld [vmem:[%s1 + $0xa8] sm:$0xf]
    %v70 = vld [vmem:[%s1 + $0xac] sm:$0xf]
    %v71 = vld [vmem:[%s1 + $0xb0] sm:$0xf]
    %v72 = vld [vmem:[%s1 + $0xb4] sm:$0xf]
    %v73 = vld [vmem:[%s1 + $0xb8] sm:$0xf]
    %v74 = vld [vmem:[%s1 + $0xbc] sm:$0xf]
    %v75 = vld [vmem:[%s1 + $0xc0] sm:$0xf]
    %v76 = vld [vmem:[%s1 + $0xc4] sm:$0xf]
    %v77 = vld [vmem:[%s1 + $0xc8] sm:$0xf]
    %v78 = vld [vmem:[%s1 + $0xcc] sm:$0xf]
    %v79 = vld [vmem:[%s1 + $0xd0] sm:$0xf]
    %v80 = vld [vmem:[%s1 + $0xd4] sm:$0xf]
    %v81 = vld [vmem:[%s1 + $0xd8] sm:$0xf]
    %v82 = vld [vmem:[%s1 + $0xdc] sm:$0xf]
    %v83 = vld [vmem:[%s1 + $0xe0] sm:$0xf]
    %v84 = vld [vmem:[%s1 + $0xe4] sm:$0xf]
    %v85 = vld [vmem:[%s1 + $0xe8] sm:$0xf]
    %v86 = vld [vmem:[%s1 + $0xec] sm:$0xf]
    %v87 = vld [vmem:[%s1 + $0xf0] sm:$0xf]
    %v88 = vld [vmem:[%s1 + $0xf4] sm:$0xf]
    %v89 = vld [vmem:[%s1 + $0xf8] sm:$0xf]
    %v90 = vld [vmem:[%s1 + $0xfc] sm:$0xf]
    %v91 = vld [vmem:[%s1 + $0x100] sm:$0xf]
    %v92 = vld [vmem:[%s1 + $0x104] sm:$0xf]
    %v93 = vld [vmem:[%s1 + $0x108] sm:$0xf]
    %v94 = vld [vmem:[%s1 + $0x10c] sm:$0xf]
    %v95 = vld [vmem:[%s1 + $0x110] sm:$0xf]
    %v96 = vld [vmem:[%s1 + $0x114] sm:$0xf]
    %v97 = vld [vmem:[%s1 + $0x118] sm:$0xf]
    %v98 = vld [vmem:[%s1 + $0x11c] sm:$0xf]
    %v99 = vld [vmem:[%s1 + $0x120] sm:$0xf]
    %v100 = vld [vmem:[%s1 + $0x124] sm:$0xf]
    %v101 = vld [vmem:[%s1 + $0x128] sm:$0xf]
    %v102 = vld [vmem:[%s1 + $0x12c] sm:$0xf]
    %v103 = vld [vmem:[%s1 + $0x130] sm:$0xf]
    %v104 = vld [vmem:[%s1 + $0x134] sm:$0xf]
    %v105 = vld [vmem:[%s1 + $0x138] sm:$0xf]
    %v106 = vld [vmem:[%s1 + $0x13c] sm:$0xf]
    %v107 = vld [vmem:[%s1 + $0x140] sm:$0xf]
    %v108 = vld [vmem:[%s1 + $0x144] sm:$0xf]
    %v109 = vld [vmem:[%s1 + $0x148] sm:$0xf]
    %v110 = vld [vmem:[%s1 + $0x14c] sm:$0xf]
    %v111 = vld [vmem:[%s1 + $0x150] sm:$0xf]
    %v112 = vld [vmem:[%s1 + $0x154] sm:$0xf]
    %v113 = vld [vmem:[%s1 + $0x158] sm:$0xf]
    %v114 = vld [vmem:[%s1 + $0x15c] sm:$0xf]
    %v115 = vld [vmem:[%s1 + $0x160] sm:$0xf]
    %v116 = vld [vmem:[%s1 + $0x164] sm:$0xf]
    %v117 = vld [vmem:[%s1 + $0x168] sm:$0xf]
    %v118 = vld [vmem:[%s1 + $0x16c] sm:$0xf]
    %v119 = vld [vmem:[%s1 + $0x170] sm:$0xf]
    %v120 = vld [vmem:[%s1 + $0x174] sm:$0xf]
    %v121 = vld [vmem:[%s1 + $0x178] sm:$0xf]
    %v122 = vld [vmem:[%s1 + $0x17c] sm:$0xf]
    %v123 = vld [vmem:[%s1 + $0x180] sm:$0xf]
    %v124 = vld [vmem:[%s1 + $0x184] sm:$0xf]
    %v125 = vld [vmem:[%s1 + $0x188] sm:$0xf]
    %v126 = vld [vmem:[%s1 + $0x18c] sm:$0xf]
    %v127 = vld [vmem:[%s1 + $0x190] sm:$0xf]
    %v128 = vld [vmem:[%s1 + $0x194] sm:$0xf]
    %v129 = vld [vmem:[%s1 + $0x198] sm:$0xf]
    %v130 = vld [vmem:[%s1 + $0x19c] sm:$0xf]
    %v131 = vld [vmem:[%s1 + $0x1a0] sm:$0xf]
    %v132 = vld [vmem:[%s1 + $0x1a4] sm:$0xf]
    %v133 = vld [vmem:[%s1 + $0x1a8] sm:$0xf]
    %v134 = vld [vmem:[%s1 + $0x1ac] sm:$0xf]
    %v135 = vld [vmem:[%s1 + $0x1b0] sm:$0xf]
    %v136 = vld [vmem:[%s1 + $0x1b4] sm:$0xf]
    %v137 = vld [vmem:[%s1 + $0x1b8] sm:$0xf]
    %v138 = vld [vmem:[%s1 + $0x1bc] sm:$0xf]
    %v139 = vld [vmem:[%s1 + $0x1c0] sm:$0xf]
    %v140 = vld [vmem:[%s1 + $0x1c4] sm:$0xf]
    %v141 = vld [vmem:[%s1 + $0x1c8] sm:$0xf]
    %v142 = vld [vmem:[%s1 + $0x1cc] sm:$0xf]
    %v143 = vld [vmem:[%s1 + $0x1d0] sm:$0xf]
    %v144 = vld [vmem:[%s1 + $0x1d4] sm:$0xf]
    %v145 = vld [vmem:[%s1 + $0x1d8] sm:$0xf]
    %v146 = vld [vmem:[%s1 + $0x1dc] sm:$0xf]
    %v147 = vld [vmem:[%s1 + $0x1e0] sm:$0xf]
    %v148 = vld [vmem:[%s1 + $0x1e4] sm:$0xf]
    %v149 = vld [vmem:[%s1 + $0x1e8] sm:$0xf]
    %v150 = vld [vmem:[%s1 + $0x1ec] sm:$0xf]
    %v151 = vld [vmem:[%s1 + $0x1f0] sm:$0xf]
    %v152 = vld [vmem:[%s1 + $0x1f4] sm:$0xf]
    %v153 = vld [vmem:[%s1 + $0x1f8] sm:$0xf]
    %v154 = vld [vmem:[%s1 + $0x1fc] sm:$0xf]
    %v155 = vld [vmem:[%s1 + $0x200] sm:$0xf]
    %v156 = vld [vmem:[%s1 + $0x204] sm:$0xf]
    %v157 = vld [vmem:[%s1 + $0x208] sm:$0xf]
    %v158 = vld [vmem:[%s1 + $0x20c] sm:$0xf]
    %v159 = vld [vmem:[%s1 + $0x210] sm:$0xf]
    %v160 = vld [vmem:[%s1 + $0x214] sm:$0xf]
    %v161 = vld [vmem:[%s1 + $0x218] sm:$0xf]
    %v162 = vld [vmem:[%s1 + $0x21c] sm:$0xf]
    %v163 = vld [vmem:[%s1 + $0x220] sm:$0xf]
    %v164 = vld [vmem:[%s1 + $0x224] sm:$0xf]
    %v165 = vld [vmem:[%s1 + $0x228] sm:$0xf]
    %v166 = vld [vmem:[%s1 + $0x22c] sm:$0xf]
    %v167 = vld [vmem:[%s1 + $0x230] sm:$0xf]
    %v168 = vld [vmem:[%s1 + $0x234] sm:$0xf]
    %v169 = vld [vmem:[%s1 + $0x238] sm:$0xf]
    %v170 = vld [vmem:[%s1 + $0x23c] sm:$0xf]
    %v171 = vld [vmem:[%s1 + $0x240] sm:$0xf]
    %v172 = vld [vmem:[%s1 + $0x244] sm:$0xf]
    %v173 = vld [vmem:[%s1 + $0x248] sm:$0xf]
    %v174 = vld [vmem:[%s1 + $0x24c] sm:$0xf]
    %v175 = vld [vmem:[%s1 + $0x250] sm:$0xf]
    %v176 = vld [vmem:[%s1 + $0x254] sm:$0xf]
    %v177 = vld [vmem:[%s1 + $0x258] sm:$0xf]
    %v178 = vld [vmem:[%s1 + $0x25c] sm:$0xf]
    %v179 = vld [vmem:[%s1 + $0x260] sm:$0xf]
    %v180 = vld [vmem:[%s1 + $0x264] sm:$0xf]
    %v181 = vld [vmem:[%s1 + $0x268] sm:$0xf]
    %v182 = vld [vmem:[%s1 + $0x26c] sm:$0xf]
    %v183 = vld [vmem:[%s1 + $0x270] sm:$0xf]
    %v184 = vld [vmem:[%s1 + $0x274] sm:$0xf]
    %v185 = vld [vmem:[%s1 + $0x278] sm:$0xf]
    %v186 = vld [vmem:[%s1 + $0x27c] sm:$0xf]
    %v187 = vld [vmem:[%s1 + $0x280] sm:$0xf]
    %v188 = vld [vmem:[%s1 + $0x284] sm:$0xf]
    %v189 = vld [vmem:[%s1 + $0x288] sm:$0xf]
    %v190 = vld [vmem:[%s1 + $0x28c] sm:$0xf]
    %v191 = vld [vmem:[%s1 + $0x290] sm:$0xf]
    %v192 = vld [vmem:[%s1 + $0x294] sm:$0xf]
    %v193 = vld [vmem:[%s1 + $0x298] sm:$0xf]
    %v194 = vld [vmem:[%s1 + $0x29c] sm:$0xf]
    %v195 = vld [vmem:[%s1 + $0x2a0] sm:$0xf]
    %v196 = vld [vmem:[%s1 + $0x2a4] sm:$0xf]
    %v197 = vld [vmem:[%s1 + $0x2a8] sm:$0xf]
    %v198 = vld [vmem:[%s1 + $0x2ac] sm:$0xf]
    %v199 = vld [vmem:[%s1 + $0x2b0] sm:$0xf]
    %v200 = vld [vmem:[%s1 + $0x2b4] sm:$0xf]
    %v201 = vld [vmem:[%s1 + $0x2b8] sm:$0xf]
    %v202 = vld [vmem:[%s1 + $0x2bc] sm:$0xf]
    %v203 = vld [vmem:[%s1 + $0x2c0] sm:$0xf]
    %v204 = vld [vmem:[%s1 + $0x2c4] sm:$0xf]
    %v205 = vld [vmem:[%s1 + $0x2c8] sm:$0xf]
    %v206 = vld [vmem:[%s1 + $0x2cc] sm:$0xf]
    %v207 = vld [vmem:[%s1 + $0x2d0] sm:$0xf]
    %v208 = vld [vmem:[%s1 + $0x2d4] sm:$0xf]
    %v209 = vld [vmem:[%s1 + $0x2d8] sm:$0xf]
    %v210 = vld [vmem:[%s1 + $0x2dc] sm:$0xf]
    %v211 = vld [vmem:[%s1 + $0x2e0] sm:$0xf]
    %v212 = vld [vmem:[%s1 + $0x2e4] sm:$0xf]
    %v213 = vld [vmem:[%s1 + $0x2e8] sm:$0xf]
    %v214 = vld [vmem:[%s1 + $0x2ec] sm:$0xf]
    %v215 = vld [vmem:[%s1 + $0x2f0] sm:$0xf]
    %v216 = vld [vmem:[%s1 + $0x2f4] sm:$0xf]
    %v217 = vld [vmem:[%s1 + $0x2f8] sm:$0xf]
    %v218 = vld [vmem:[%s1 + $0x2fc] sm:$0xf]
    %v219 = vld [vmem:[%s1 + $0x300] sm:$0xf]
    %v220 = vld [vmem:[%s1 + $0x304] sm:$0xf]
    %v221 = vld [vmem:[%s1 + $0x308] sm:$0xf]
    %v222 = vld [vmem:[%s1 + $0x30c] sm:$0xf]
    %v223 = vld [vmem:[%s1 + $0x310] sm:$0xf]
    %v224 = vld [vmem:[%s1 + $0x314] sm:$0xf]
    %v225 = vld [vmem:[%s1 + $0x318] sm:$0xf]
    %v226 = vld [vmem:[%s1 + $0x31c] sm:$0xf]
    %v227 = vld [vmem:[%s1 + $0x320] sm:$0xf]
    %v228 = vld [vmem:[%s1 + $0x324] sm:$0xf]
    %v229 = vld [vmem:[%s1 + $0x328] sm:$0xf]
    %v230 = vld [vmem:[%s1 + $0x32c] sm:$0xf]
    %v231 = vld [vmem:[%s1 + $0x330] sm:$0xf]
    %v232 = vld [vmem:[%s1 + $0x334] sm:$0xf]
    %v233 = vld [vmem:[%s1 + $0x338] sm:$0xf]
    %v234 = vld [vmem:[%s1 + $0x33c] sm:$0xf]
    %v235 = vld [vmem:[%s1 + $0x340] sm:$0xf]
    %v236 = vld [vmem:[%s1 + $0x344] sm:$0xf]
    %v237 = vld [vmem:[%s1 + $0x348] sm:$0xf]
    %v238 = vld [vmem:[%s1 + $0x34c] sm:$0xf]
    %v239 = vld [vmem:[%s1 + $0x350] sm:$0xf]
    %v240 = vld [vmem:[%s1 + $0x354] sm:$0xf]
    %v241 = vld [vmem:[%s1 + $0x358] sm:$0xf]
    %v242 = vld [vmem:[%s1 + $0x35c] sm:$0xf]
    %v243 = vld [vmem:[%s1 + $0x360] sm:$0xf]
    %v244 = vld [vmem:[%s1 + $0x364] sm:$0xf]
    %v245 = vld [vmem:[%s1 + $0x368] sm:$0xf]
    %v246 = vld [vmem:[%s1 + $0x36c] sm:$0xf]
    %v247 = vld [vmem:[%s1 + $0x370] sm:$0xf]
    %v248 = vld [vmem:[%s1 + $0x374] sm:$0xf]
    %v249 = vld [vmem:[%s1 + $0x378] sm:$0xf]
    %v250 = vld [vmem:[%s1 + $0x37c] sm:$0xf]
    %v251 = vld [vmem:[%s1 + $0x380] sm:$0xf]
    %v252 = vld [vmem:[%s1 + $0x384] sm:$0xf]
    %v253 = vld [vmem:[%s1 + $0x388] sm:$0xf]
    %v254 = vld [vmem:[%s1 + $0x38c] sm:$0xf]
    %v255 = vld [vmem:[%s1 + $0x390] sm:$0xf]
    %v256 = vld [vmem:[%s1 + $0x394] sm:$0xf]
    %v257 = vld [vmem:[%s1 + $0x398] sm:$0xf]
    %v258 = vld [vmem:[%s1 + $0x39c] sm:$0xf]
    %v259 = vld [vmem:[%s1 + $0x3a0] sm:$0xf]
    %v260 = vld [vmem:[%s1 + $0x3a4] sm:$0xf]
    %v261 = vld [vmem:[%s1 + $0x3a8] sm:$0xf]
    %v262 = vld [vmem:[%s1 + $0x3ac] sm:$0xf]
    %v263 = vld [vmem:[%s1 + $0x3b0] sm:$0xf]
    %v264 = vld [vmem:[%s1 + $0x3b4] sm:$0xf]
    %v265 = vld [vmem:[%s1 + $0x3b8] sm:$0xf]
    %v266 = vld [vmem:[%s1 + $0x3bc] sm:$0xf]
    %v267 = vld [vmem:[%s1 + $0x3c0] sm:$0xf]
    %v268 = vld [vmem:[%s1 + $0x3c4] sm:$0xf]
    %v269 = vld [vmem:[%s1 + $0x3c8] sm:$0xf]
    %v270 = vld [vmem:[%s1 + $0x3cc] sm:$0xf]
    %v271 = vld [vmem:[%s1 + $0x3d0] sm:$0xf]
    %v272 = vld [vmem:[%s1 + $0x3d4] sm:$0xf]
    %v273 = vld [vmem:[%s1 + $0x3d8] sm:$0xf]
    %v274 = vld [vmem:[%s1 + $0x3dc] sm:$0xf]
    %v275 = vld [vmem:[%s1 + $0x3e0] sm:$0xf]
    %v276 = vld [vmem:[%s1 + $0x3e4] sm:$0xf]
    %v277 = vld [vmem:[%s1 + $0x3e8] sm:$0xf]
    %v278 = vld [vmem:[%s1 + $0x3ec] sm:$0xf]
    %v279 = vld [vmem:[%s1 + $0x3f0] sm:$0xf]
    %v280 = vld [vmem:[%s1 + $0x3f4] sm:$0xf]
    %v281 = vld [vmem:[%s1 + $0x3f8] sm:$0xf]
    %v282 = vld [vmem:[%s1 + $0x3fc] sm:$0xf]
    %v283 = vld [vmem:[%s1 + $0x400] sm:$0xf]
    %v284 = vld [vmem:[%s1 + $0x404] sm:$0xf]
    %v285 = vld [vmem:[%s1 + $0x408] sm:$0xf]
    %v286 = vld [vmem:[%s1 + $0x40c] sm:$0xf]
    %v287 = vld [vmem:[%s1 + $0x410] sm:$0xf]
    %v288 = vld [vmem:[%s1 + $0x414] sm:$0xf]
    %v289 = vld [vmem:[%s1 + $0x418] sm:$0xf]
    %v290 = vld [vmem:[%s1 + $0x41c] sm:$0xf]
    %v291 = vld [vmem:[%s1 + $0x420] sm:$0xf]
    %v292 = vld [vmem:[%s1 + $0x424] sm:$0xf]
    %v293 = vld [vmem:[%s1 + $0x428] sm:$0xf]
    %v294 = vld [vmem:[%s1 + $0x42c] sm:$0xf]
    %v295 = vld [vmem:[%s1 + $0x430] sm:$0xf]
    %v296 = vld [vmem:[%s1 + $0x434] sm:$0xf]
    %v297 = vld [vmem:[%s1 + $0x438] sm:$0xf]
    %v298 = vld [vmem:[%s1 + $0x43c] sm:$0xf]
    %v299 = vld [vmem:[%s1 + $0x440] sm:$0xf]
    %v300 = vld [vmem:[%s1 + $0x444] sm:$0xf]
    %v301 = vld [vmem:[%s1 + $0x448] sm:$0xf]
    %v302 = vld [vmem:[%s1 + $0x44c] sm:$0xf]
    %v303 = vld [vmem:[%s1 + $0x450] sm:$0xf]
    %v304 = vld [vmem:[%s1 + $0x454] sm:$0xf]
    %v305 = vld [vmem:[%s1 + $0x458] sm:$0xf]
    %v306 = vld [vmem:[%s1 + $0x45c] sm:$0xf]
    %v307 = vld [vmem:[%s1 + $0x460] sm:$0xf]
    %v308 = vld [vmem:[%s1 + $0x464] sm:$0xf]
    %v309 = vld [vmem:[%s1 + $0x468] sm:$0xf]
    %v310 = vld [vmem:[%s1 + $0x46c] sm:$0xf]
    %v311 = vld [vmem:[%s1 + $0x470] sm:$0xf]
    %v312 = vld [vmem:[%s1 + $0x474] sm:$0xf]
    %v313 = vld [vmem:[%s1 + $0x478] sm:$0xf]
    %v314 = vld [vmem:[%s1 + $0x47c] sm:$0xf]
    %v315 = vld [vmem:[%s1 + $0x480] sm:$0xf]
    %v316 = vld [vmem:[%s1 + $0x484] sm:$0xf]
    %v317 = vld [vmem:[%s1 + $0x488] sm:$0xf]
    %v318 = vld [vmem:[%s1 + $0x48c] sm:$0xf]
    %v319 = vld [vmem:[%s1 + $0x490] sm:$0xf]
    %v320 = vld [vmem:[%s1 + $0x494] sm:$0xf]
    %v321 = vld [vmem:[%s1 + $0x498] sm:$0xf]
    %v322 = vld [vmem:[%s1 + $0x49c] sm:$0xf]
    %v323 = vld [vmem:[%s1 + $0x4a0] sm:$0xf]
    %v324 = vld [vmem:[%s1 + $0x4a4] sm:$0xf]
    %v325 = vld [vmem:[%s1 + $0x4a8] sm:$0xf]
    %v326 = vld [vmem:[%s1 + $0x4ac] sm:$0xf]
    %v327 = vld [vmem:[%s1 + $0x4b0] sm:$0xf]
    %v328 = vld [vmem:[%s1 + $0x4b4] sm:$0xf]
    %v329 = vld [vmem:[%s1 + $0x4b8] sm:$0xf]
    %v330 = vld [vmem:[%s1 + $0x4bc] sm:$0xf]
    %v331 = vld [vmem:[%s1 + $0x4c0] sm:$0xf]
    %v332 = vld [vmem:[%s1 + $0x4c4] sm:$0xf]
    %v333 = vld [vmem:[%s1 + $0x4c8] sm:$0xf]
    %v334 = vld [vmem:[%s1 + $0x4cc] sm:$0xf]
    %v335 = vld [vmem:[%s1 + $0x4d0] sm:$0xf]
    %v336 = vld [vmem:[%s1 + $0x4d4] sm:$0xf]
    %v337 = vld [vmem:[%s1 + $0x4d8] sm:$0xf]
    %v338 = vld [vmem:[%s1 + $0x4dc] sm:$0xf]
    %v339 = vld [vmem:[%s1 + $0x4e0] sm:$0xf]
    %v340 = vld [vmem:[%s1 + $0x4e4] sm:$0xf]
    %v341 = vld [vmem:[%s1 + $0x4e8] sm:$0xf]
    %v342 = vld [vmem:[%s1 + $0x4ec] sm:$0xf]
    %v343 = vld [vmem:[%s1 + $0x4f0] sm:$0xf]
    %v344 = vld [vmem:[%s1 + $0x4f4] sm:$0xf]
    %v345 = vld [vmem:[%s1 + $0x4f8] sm:$0xf]
    %v346 = vld [vmem:[%s1 + $0x4fc] sm:$0xf]
    %v347 = vld [vmem:[%s1 + $0x500] sm:$0xf]
    %v348 = vld [vmem:[%s1 + $0x504] sm:$0xf]
    %v349 = vld [vmem:[%s1 + $0x508] sm:$0xf]
    %v350 = vld [vmem:[%s1 + $0x50c] sm:$0xf]
    %v351 = vld [vmem:[%s1 + $0x510] sm:$0xf]
    %v352 = vld [vmem:[%s1 + $0x514] sm:$0xf]
    %v353 = vld [vmem:[%s1 + $0x518] sm:$0xf]
    %v354 = vld [vmem:[%s1 + $0x51c] sm:$0xf]
    %v355 = vld [vmem:[%s1 + $0x520] sm:$0xf]
    %v356 = vld [vmem:[%s1 + $0x524] sm:$0xf]
    %v357 = vld [vmem:[%s1 + $0x528] sm:$0xf]
    %v358 = vld [vmem:[%s1 + $0x52c] sm:$0xf]
    %v359 = vld [vmem:[%s1 + $0x530] sm:$0xf]
    %v360 = vld [vmem:[%s1 + $0x534] sm:$0xf]
    %v361 = vld [vmem:[%s1 + $0x538] sm:$0xf]
    %v362 = vld [vmem:[%s1 + $0x53c] sm:$0xf]
    %v363 = vld [vmem:[%s1 + $0x540] sm:$0xf]
    %v364 = vld [vmem:[%s1 + $0x544] sm:$0xf]
    %v365 = vld [vmem:[%s1 + $0x548] sm:$0xf]
    %v366 = vld [vmem:[%s1 + $0x54c] sm:$0xf]
    %v367 = vld [vmem:[%s1 + $0x550] sm:$0xf]
    %v368 = vld [vmem:[%s1 + $0x554] sm:$0xf]
    %v369 = vld [vmem:[%s1 + $0x558] sm:$0xf]
    %v370 = vld [vmem:[%s1 + $0x55c] sm:$0xf]
    %v371 = vld [vmem:[%s1 + $0x560] sm:$0xf]
    %v372 = vld [vmem:[%s1 + $0x564] sm:$0xf]
    %v373 = vld [vmem:[%s1 + $0x568] sm:$0xf]
    %v374 = vld [vmem:[%s1 + $0x56c] sm:$0xf]
    %v375 = vld [vmem:[%s1 + $0x570] sm:$0xf]
    %v376 = vld [vmem:[%s1 + $0x574] sm:$0xf]
    %v377 = vld [vmem:[%s1 + $0x578] sm:$0xf]
    %v378 = vld [vmem:[%s1 + $0x57c] sm:$0xf]
    %v379 = vld [vmem:[%s1 + $0x580] sm:$0xf]
    %v380 = vld [vmem:[%s1 + $0x584] sm:$0xf]
    %v381 = vld [vmem:[%s1 + $0x588] sm:$0xf]
    %v382 = vld [vmem:[%s1 + $0x58c] sm:$0xf]
    %v383 = vld [vmem:[%s1 + $0x590] sm:$0xf]
    %v384 = vld [vmem:[%s1 + $0x594] sm:$0xf]
    %v385 = vld [vmem:[%s1 + $0x598] sm:$0xf]
    %v386 = vld [vmem:[%s1 + $0x59c] sm:$0xf]
    %v387 = vld [vmem:[%s1 + $0x5a0] sm:$0xf]
    %v388 = vld [vmem:[%s1 + $0x5a4] sm:$0xf]
    %v389 = vld [vmem:[%s1 + $0x5a8] sm:$0xf]
    %v390 = vld [vmem:[%s1 + $0x5ac] sm:$0xf]
    %v391 = vld [vmem:[%s1 + $0x5b0] sm:$0xf]
    %v392 = vld [vmem:[%s1 + $0x5b4] sm:$0xf]
    %v393 = vld [vmem:[%s1 + $0x5b8] sm:$0xf]
    %v394 = vld [vmem:[%s1 + $0x5bc] sm:$0xf]
    %v395 = vld [vmem:[%s1 + $0x5c0] sm:$0xf]
    %v396 = vld [vmem:[%s1 + $0x5c4] sm:$0xf]
    %v397 = vld [vmem:[%s1 + $0x5c8] sm:$0xf]
    %v398 = vld [vmem:[%s1 + $0x5cc] sm:$0xf]
    %v399 = vld [vmem:[%s1 + $0x5d0] sm:$0xf]
    %v400 = vld [vmem:[%s1 + $0x5d4] sm:$0xf]
    %v401 = vld [vmem:[%s1 + $0x5d8] sm:$0xf]
    %v402 = vld [vmem:[%s1 + $0x5dc] sm:$0xf]
    %v403 = vld [vmem:[%s1 + $0x5e0] sm:$0xf]
    %v404 = vld [vmem:[%s1 + $0x5e4] sm:$0xf]
    %v405 = vld [vmem:[%s1 + $0x5e8] sm:$0xf]
    %v406 = vld [vmem:[%s1 + $0x5ec] sm:$0xf]
    %v407 = vld [vmem:[%s1 + $0x5f0] sm:$0xf]
    %v408 = vld [vmem:[%s1 + $0x5f4] sm:$0xf]
    %v409 = vld [vmem:[%s1 + $0x5f8] sm:$0xf]
    %v410 = vld [vmem:[%s1 + $0x5fc] sm:$0xf]
    %v411 = vld [vmem:[%s1 + $0x600] sm:$0xf]
    %v412 = vld [vmem:[%s1 + $0x604] sm:$0xf]
    %v413 = vld [vmem:[%s1 + $0x608] sm:$0xf]
    %v414 = vld [vmem:[%s1 + $0x60c] sm:$0xf]
    %v415 = vld [vmem:[%s1 + $0x610] sm:$0xf]
    %v416 = vld [vmem:[%s1 + $0x614] sm:$0xf]
    %v417 = vld [vmem:[%s1 + $0x618] sm:$0xf]
    %v418 = vld [vmem:[%s1 + $0x61c] sm:$0xf]
    %v419 = vld [vmem:[%s1 + $0x620] sm:$0xf]
    %v420 = vld [vmem:[%s1 + $0x624] sm:$0xf]
    %v421 = vld [vmem:[%s1 + $0x628] sm:$0xf]
    %v422 = vld [vmem:[%s1 + $0x62c] sm:$0xf]
    %v423 = vld [vmem:[%s1 + $0x630] sm:$0xf]
    %v424 = vld [vmem:[%s1 + $0x634] sm:$0xf]
    %v425 = vld [vmem:[%s1 + $0x638] sm:$0xf]
    %v426 = vld [vmem:[%s1 + $0x63c] sm:$0xf]
    %v427 = vld [vmem:[%s1 + $0x640] sm:$0xf]
    %v428 = vld [vmem:[%s1 + $0x644] sm:$0xf]
    %v429 = vld [vmem:[%s1 + $0x648] sm:$0xf]
    %v430 = vld [vmem:[%s1 + $0x64c] sm:$0xf]
    %v431 = vld [vmem:[%s1 + $0x650] sm:$0xf]
    %v432 = vld [vmem:[%s1 + $0x654] sm:$0xf]
    %v433 = vld [vmem:[%s1 + $0x658] sm:$0xf]
    %v434 = vld [vmem:[%s1 + $0x65c] sm:$0xf]
    %v435 = vld [vmem:[%s1 + $0x660] sm:$0xf]
    %v436 = vld [vmem:[%s1 + $0x664] sm:$0xf]
    %v437 = vld [vmem:[%s1 + $0x668] sm:$0xf]
    %v438 = vld [vmem:[%s1 + $0x66c] sm:$0xf]
    %v439 = vld [vmem:[%s1 + $0x670] sm:$0xf]
    %v440 = vld [vmem:[%s1 + $0x674] sm:$0xf]
    %v441 = vld [vmem:[%s1 + $0x678] sm:$0xf]
    %v442 = vld [vmem:[%s1 + $0x67c] sm:$0xf]
    %v443 = vld [vmem:[%s1 + $0x680] sm:$0xf]
    %v444 = vld [vmem:[%s1 + $0x684] sm:$0xf]
    %v445 = vld [vmem:[%s1 + $0x688] sm:$0xf]
    %v446 = vld [vmem:[%s1 + $0x68c] sm:$0xf]
    %v447 = vld [vmem:[%s1 + $0x690] sm:$0xf]
    %v448 = vld [vmem:[%s1 + $0x694] sm:$0xf]
    %v449 = vld [vmem:[%s1 + $0x698] sm:$0xf]
    %v450 = vld [vmem:[%s1 + $0x69c] sm:$0xf]
    %v451 = vld [vmem:[%s1 + $0x6a0] sm:$0xf]
    %v452 = vld [vmem:[%s1 + $0x6a4] sm:$0xf]
    %v453 = vld [vmem:[%s1 + $0x6a8] sm:$0xf]
    %v454 = vld [vmem:[%s1 + $0x6ac] sm:$0xf]
    %v455 = vld [vmem:[%s1 + $0x6b0] sm:$0xf]
    %v456 = vld [vmem:[%s1 + $0x6b4] sm:$0xf]
    %v457 = vld [vmem:[%s1 + $0x6b8] sm:$0xf]
    %v458 = vld [vmem:[%s1 + $0x6bc] sm:$0xf]
    %v459 = vld [vmem:[%s1 + $0x6c0] sm:$0xf]
    %v460 = vld [vmem:[%s1 + $0x6c4] sm:$0xf]
    %v461 = vld [vmem:[%s1 + $0x6c8] sm:$0xf]
    %v462 = vld [vmem:[%s1 + $0x6cc] sm:$0xf]
    %v463 = vld [vmem:[%s1 + $0x6d0] sm:$0xf]
    %v464 = vld [vmem:[%s1 + $0x6d4] sm:$0xf]
    %v465 = vld [vmem:[%s1 + $0x6d8] sm:$0xf]
    %v466 = vld [vmem:[%s1 + $0x6dc] sm:$0xf]
    %v467 = vld [vmem:[%s1 + $0x6e0] sm:$0xf]
    %v468 = vld [vmem:[%s1 + $0x6e4] sm:$0xf]
    %v469 = vld [vmem:[%s1 + $0x6e8] sm:$0xf]
    %v470 = vld [vmem:[%s1 + $0x6ec] sm:$0xf]
    %v471 = vld [vmem:[%s1 + $0x6f0] sm:$0xf]
    %v472 = vld [vmem:[%s1 + $0x6f4] sm:$0xf]
    %v473 = vld [vmem:[%s1 + $0x6f8] sm:$0xf]
    %v474 = vld [vmem:[%s1 + $0x6fc] sm:$0xf]
    %v475 = vld [vmem:[%s1 + $0x700] sm:$0xf]
    %v476 = vld [vmem:[%s1 + $0x704] sm:$0xf]
    %v477 = vld [vmem:[%s1 + $0x708] sm:$0xf]
    %v478 = vld [vmem:[%s1 + $0x70c] sm:$0xf]
    %v479 = vld [vmem:[%s1 + $0x710] sm:$0xf]
    %v480 = vld [vmem:[%s1 + $0x714] sm:$0xf]
    %v481 = vld [vmem:[%s1 + $0x718] sm:$0xf]
    %v482 = vld [vmem:[%s1 + $0x71c] sm:$0xf]
    %v483 = vld [vmem:[%s1 + $0x720] sm:$0xf]
    %v484 = vld [vmem:[%s1 + $0x724] sm:$0xf]
    %v485 = vld [vmem:[%s1 + $0x728] sm:$0xf]
    %v486 = vld [vmem:[%s1 + $0x72c] sm:$0xf]
    %v487 = vld [vmem:[%s1 + $0x730] sm:$0xf]
    %v488 = vld [vmem:[%s1 + $0x734] sm:$0xf]
    %v489 = vld [vmem:[%s1 + $0x738] sm:$0xf]
    %v490 = vld [vmem:[%s1 + $0x73c] sm:$0xf]
    %v491 = vld [vmem:[%s1 + $0x740] sm:$0xf]
    %v492 = vld [vmem:[%s1 + $0x744] sm:$0xf]
    %v493 = vld [vmem:[%s1 + $0x748] sm:$0xf]
    %v494 = vld [vmem:[%s1 + $0x74c] sm:$0xf]
    %v495 = vld [vmem:[%s1 + $0x750] sm:$0xf]
    %v496 = vld [vmem:[%s1 + $0x754] sm:$0xf]
    %v497 = vld [vmem:[%s1 + $0x758] sm:$0xf]
    %v498 = vld [vmem:[%s1 + $0x75c] sm:$0xf]
    %v499 = vld [vmem:[%s1 + $0x760] sm:$0xf]
    %v500 = vld [vmem:[%s1 + $0x764] sm:$0xf]
    %v501 = vld [vmem:[%s1 + $0x768] sm:$0xf]
    %v502 = vld [vmem:[%s1 + $0x76c] sm:$0xf]
    %v503 = vld [vmem:[%s1 + $0x770] sm:$0xf]
    %v504 = vld [vmem:[%s1 + $0x774] sm:$0xf]
    %v505 = vld [vmem:[%s1 + $0x778] sm:$0xf]
    %v506 = vld [vmem:[%s1 + $0x77c] sm:$0xf]
    %v507 = vld [vmem:[%s1 + $0x780] sm:$0xf]
    %v508 = vld [vmem:[%s1 + $0x784] sm:$0xf]
    %v509 = vld [vmem:[%s1 + $0x788] sm:$0xf]
    %v510 = vld [vmem:[%s1 + $0x78c] sm:$0xf]
    %v511 = vld [vmem:[%s1 + $0x790] sm:$0xf]
    %v512 = vld [vmem:[%s1 + $0x794] sm:$0xf]
    %v513 = vld [vmem:[%s1 + $0x798] sm:$0xf]
    %v514 = vld [vmem:[%s1 + $0x79c] sm:$0xf]
    %v515 = vld [vmem:[%s1 + $0x7a0] sm:$0xf]
    %v516 = vld [vmem:[%s1 + $0x7a4] sm:$0xf]
    %v517 = vld [vmem:[%s1 + $0x7a8] sm:$0xf]
    %v518 = vld [vmem:[%s1 + $0x7ac] sm:$0xf]
    %v519 = vld [vmem:[%s1 + $0x7b0] sm:$0xf]
    %v520 = vld [vmem:[%s1 + $0x7b4] sm:$0xf]
    %v521 = vld [vmem:[%s1 + $0x7b8] sm:$0xf]
    %v522 = vld [vmem:[%s1 + $0x7bc] sm:$0xf]
    %v523 = vld [vmem:[%s1 + $0x7c0] sm:$0xf]
    %v524 = vld [vmem:[%s1 + $0x7c4] sm:$0xf]
    %v525 = vld [vmem:[%s1 + $0x7c8] sm:$0xf]
    %v526 = vld [vmem:[%s1 + $0x7cc] sm:$0xf]
    %v527 = vld [vmem:[%s1 + $0x7d0] sm:$0xf]
    %v528 = vld [vmem:[%s1 + $0x7d4] sm:$0xf]
    %v529 = vld [vmem:[%s1 + $0x7d8] sm:$0xf]
    %v530 = vld [vmem:[%s1 + $0x7dc] sm:$0xf]
    %v531 = vld [vmem:[%s1 + $0x7e0] sm:$0xf]
    %v532 = vld [vmem:[%s1 + $0x7e4] sm:$0xf]
    %v533 = vld [vmem:[%s1 + $0x7e8] sm:$0xf]
    %v534 = vld [vmem:[%s1 + $0x7ec] sm:$0xf]
    %v535 = vld [vmem:[%s1 + $0x7f0] sm:$0xf]
    %v536 = vld [vmem:[%s1 + $0x7f4] sm:$0xf]
    %v537 = vld [vmem:[%s1 + $0x7f8] sm:$0xf]
    %v538 = vld [vmem:[%s1 + $0x7fc] sm:$0xf]
    %v539 = vld [vmem:[%s1 + $0x800] sm:$0xf]
    %v540 = vld [vmem:[%s1 + $0x804] sm:$0xf]
    %v541 = vld [vmem:[%s1 + $0x808] sm:$0xf]
    %v542 = vld [vmem:[%s1 + $0x80c] sm:$0xf]
    %v543 = vld [vmem:[%s1 + $0x810] sm:$0xf]
    %v544 = vld [vmem:[%s1 + $0x814] sm:$0xf]
    %v545 = vld [vmem:[%s1 + $0x818] sm:$0xf]
    %v546 = vld [vmem:[%s1 + $0x81c] sm:$0xf]
    %v547 = vld [vmem:[%s1 + $0x820] sm:$0xf]
    %v548 = vld [vmem:[%s1 + $0x824] sm:$0xf]
    %v549 = vld [vmem:[%s1 + $0x828] sm:$0xf]
    %v550 = vld [vmem:[%s1 + $0x82c] sm:$0xf]
    %v551 = vld [vmem:[%s1 + $0x830] sm:$0xf]
    %v552 = vld [vmem:[%s1 + $0x834] sm:$0xf]
    %v553 = vld [vmem:[%s1 + $0x838] sm:$0xf]
    %v554 = vld [vmem:[%s1 + $0x83c] sm:$0xf]
    %v555 = vld [vmem:[%s1 + $0x840] sm:$0xf]
    %v556 = vld [vmem:[%s1 + $0x844] sm:$0xf]
    %v557 = vld [vmem:[%s1 + $0x848] sm:$0xf]
    %v558 = vld [vmem:[%s1 + $0x84c] sm:$0xf]
    %v559 = vld [vmem:[%s1 + $0x850] sm:$0xf]
    %v560 = vld [vmem:[%s1 + $0x854] sm:$0xf]
    %v561 = vld [vmem:[%s1 + $0x858] sm:$0xf]
    %v562 = vld [vmem:[%s1 + $0x85c] sm:$0xf]
    %v563 = vld [vmem:[%s1 + $0x860] sm:$0xf]
    %v564 = vld [vmem:[%s1 + $0x864] sm:$0xf]
    %v565 = vld [vmem:[%s1 + $0x868] sm:$0xf]
    %v566 = vld [vmem:[%s1 + $0x86c] sm:$0xf]
    %v567 = vld [vmem:[%s1 + $0x870] sm:$0xf]
    %v568 = vld [vmem:[%s1 + $0x874] sm:$0xf]
    %v569 = vld [vmem:[%s1 + $0x878] sm:$0xf]
    %v570 = vld [vmem:[%s1 + $0x87c] sm:$0xf]
    %v571 = vld [vmem:[%s1 + $0x880] sm:$0xf]
    %v572 = vld [vmem:[%s1 + $0x884] sm:$0xf]
    %v573 = vld [vmem:[%s1 + $0x888] sm:$0xf]
    %v574 = vld [vmem:[%s1 + $0x88c] sm:$0xf]
    %v575 = vld [vmem:[%s1 + $0x890] sm:$0xf]
    %v576 = vld [vmem:[%s1 + $0x894] sm:$0xf]
    %v577 = vld [vmem:[%s1 + $0x898] sm:$0xf]
    %v578 = vld [vmem:[%s1 + $0x89c] sm:$0xf]
    %v579 = vld [vmem:[%s1 + $0x8a0] sm:$0xf]
    %v580 = vld [vmem:[%s1 + $0x8a4] sm:$0xf]
    %v581 = vld [vmem:[%s1 + $0x8a8] sm:$0xf]
    %v582 = vld [vmem:[%s1 + $0x8ac] sm:$0xf]
    %v583 = vld [vmem:[%s1 + $0x8b0] sm:$0xf]
    %v584 = vld [vmem:[%s1 + $0x8b4] sm:$0xf]
    %v585 = vld [vmem:[%s1 + $0x8b8] sm:$0xf]
    %v586 = vld [vmem:[%s1 + $0x8bc] sm:$0xf]
    %v587 = vld [vmem:[%s1 + $0x8c0] sm:$0xf]
    %v588 = vld [vmem:[%s1 + $0x8c4] sm:$0xf]
    %v589 = vld [vmem:[%s1 + $0x8c8] sm:$0xf]
    %v590 = vld [vmem:[%s1 + $0x8cc] sm:$0xf]
    %v591 = vld [vmem:[%s1 + $0x8d0] sm:$0xf]
    %v592 = vld [vmem:[%s1 + $0x8d4] sm:$0xf]
    %v593 = vld [vmem:[%s1 + $0x8d8] sm:$0xf]
    %v594 = vld [vmem:[%s1 + $0x8dc] sm:$0xf]
    %v595 = vld [vmem:[%s1 + $0x8e0] sm:$0xf]
    %v596 = vld [vmem:[%s1 + $0x8e4] sm:$0xf]
    %v597 = vld [vmem:[%s1 + $0x8e8] sm:$0xf]
    %v598 = vld [vmem:[%s1 + $0x8ec] sm:$0xf]
    %v599 = vld [vmem:[%s1 + $0x8f0] sm:$0xf]
    %v600 = vld [vmem:[%s1 + $0x8f4] sm:$0xf]
    %v601 = vld [vmem:[%s1 + $0x8f8] sm:$0xf]
    %v602 = vld [vmem:[%s1 + $0x8fc] sm:$0xf]
    %v603 = vld [vmem:[%s1 + $0x900] sm:$0xf]
    %v604 = vld [vmem:[%s1 + $0x904] sm:$0xf]
    %v605 = vld [vmem:[%s1 + $0x908] sm:$0xf]
    %v606 = vld [vmem:[%s1 + $0x90c] sm:$0xf]
    %v607 = vld [vmem:[%s1 + $0x910] sm:$0xf]
    %v608 = vld [vmem:[%s1 + $0x914] sm:$0xf]
    %v609 = vld [vmem:[%s1 + $0x918] sm:$0xf]
    %v610 = vld [vmem:[%s1 + $0x91c] sm:$0xf]
    %v611 = vld [vmem:[%s1 + $0x920] sm:$0xf]
    %v612 = vld [vmem:[%s1 + $0x924] sm:$0xf]
    %v613 = vld [vmem:[%s1 + $0x928] sm:$0xf]
    %v614 = vld [vmem:[%s1 + $0x92c] sm:$0xf]
    %v615 = vld [vmem:[%s2] sm:$0x1]
    %v617 = vperm.slane %v615, 0
    %620 = vst [vmem:[#allocation1] ss:$9 sm:$0xff] %v22
    %v621 = vld [vmem:[#allocation1] sm:$0xff]
    %v622 = vld [vmem:[#allocation1 + $0x9] sm:$0xff]
    %v623 = vld [vmem:[#allocation1 + $0x12] sm:$0xff]
    %v624 = vld [vmem:[#allocation1 + $0x1b] sm:$0xff]
    %v625 = vld [vmem:[#allocation1 + $0x24] sm:$0xff]
    %v626 = vld [vmem:[#allocation1 + $0x2d] sm:$0xff]
    %v627 = vld [vmem:[#allocation1 + $0x36] sm:$0xff]
    %v628 = vld [vmem:[#allocation1 + $0x3f] sm:$0xff]
    %630 = vst [vmem:[#allocation1] ss:$9 sm:$0xff] %v23
    %v631 = vld [vmem:[#allocation1] sm:$0xff]
    %v632 = vld [vmem:[#allocation1 + $0x9] sm:$0xff]
    %v633 = vld [vmem:[#allocation1 + $0x12] sm:$0xff]
    %v634 = vld [vmem:[#allocation1 + $0x1b] sm:$0xff]
    %v635 = vld [vmem:[#allocation1 + $0x24] sm:$0xff]
    %v636 = vld [vmem:[#allocation1 + $0x2d] sm:$0xff]
    %v637 = vld [vmem:[#allocation1 + $0x36] sm:$0xff]
    %v638 = vld [vmem:[#allocation1 + $0x3f] sm:$0xff]
    %640 = vst [vmem:[#allocation1] ss:$9 sm:$0xff] %v24
    %v641 = vld [vmem:[#allocation1] sm:$0xff]
    %v642 = vld [vmem:[#allocation1 + $0x9] sm:$0xff]
    %v643 = vld [vmem:[#allocation1 + $0x12] sm:$0xff]
    %v644 = vld [vmem:[#allocation1 + $0x1b] sm:$0xff]
    %v645 = vld [vmem:[#allocation1 + $0x24] sm:$0xff]
    %v646 = vld [vmem:[#allocation1 + $0x2d] sm:$0xff]
    %v647 = vld [vmem:[#allocation1 + $0x36] sm:$0xff]
    %v648 = vld [vmem:[#allocation1 + $0x3f] sm:$0xff]
    %650 = vst [vmem:[#allocation1] ss:$9 sm:$0xff] %v25
    %v651 = vld [vmem:[#allocation1] sm:$0xff]
    %v652 = vld [vmem:[#allocation1 + $0x9] sm:$0xff]
    %v653 = vld [vmem:[#allocation1 + $0x12] sm:$0xff]
    %v654 = vld [vmem:[#allocation1 + $0x1b] sm:$0xff]
    %v655 = vld [vmem:[#allocation1 + $0x24] sm:$0xff]
    %v656 = vld [vmem:[#allocation1 + $0x2d] sm:$0xff]
    %v657 = vld [vmem:[#allocation1 + $0x36] sm:$0xff]
    %v658 = vld [vmem:[#allocation1 + $0x3f] sm:$0xff]
    %660 = vst [vmem:[#allocation1] ss:$9 sm:$0xff] %v26
    %v661 = vld [vmem:[#allocation1] sm:$0xff]
    %v662 = vld [vmem:[#allocation1 + $0x9] sm:$0xff]
    %v663 = vld [vmem:[#allocation1 + $0x12] sm:$0xff]
    %v664 = vld [vmem:[#allocation1 + $0x1b] sm:$0xff]
    %v665 = vld [vmem:[#allocation1 + $0x24] sm:$0xff]
    %v1290 = vunpack.c.l.b16 %v27
    %v1291 = vunpack.c.l.b16 %v28
    %v1292 = vunpack.c.l.b16 %v29
    %v1293 = vunpack.c.l.b16 %v30
    %v1294 = vunpack.c.l.b16 %v31
    %v1295 = vunpack.c.l.b16 %v32
    %v1296 = vunpack.c.l.b16 %v33
    %v1297 = vunpack.c.l.b16 %v34
    %v1298 = vunpack.c.l.b16 %v35
    %v1299 = vunpack.c.l.b16 %v36
    %v1300 = vunpack.c.l.b16 %v37
    %v1301 = vunpack.c.l.b16 %v38
    %v1302 = vunpack.c.l.b16 %v39
    %v1303 = vunpack.c.l.b16 %v40
    %v1304 = vunpack.c.l.b16 %v41
    %v1305 = vunpack.c.l.b16 %v42
    %v1306 = vunpack.c.l.b16 %v43
    %v1307 = vunpack.c.l.b16 %v44
    %v1308 = vunpack.c.l.b16 %v45
    %v1309 = vunpack.c.l.b16 %v46
    %v1310 = vunpack.c.l.b16 %v47
    %v1311 = vunpack.c.l.b16 %v48
    %v1312 = vunpack.c.l.b16 %v49
    %v1313 = vunpack.c.l.b16 %v50
    %v1314 = vunpack.c.l.b16 %v51
    %v1315 = vunpack.c.l.b16 %v52
    %v1316 = vunpack.c.l.b16 %v53
    %v1317 = vunpack.c.l.b16 %v54
    %v1318 = vunpack.c.l.b16 %v55
    %v1319 = vunpack.c.l.b16 %v56
    %v1320 = vunpack.c.l.b16 %v57
    %v1321 = vunpack.c.l.b16 %v58
    %v1322 = vunpack.c.l.b16 %v59
    %v1323 = vunpack.c.l.b16 %v60
    %v1324 = vunpack.c.l.b16 %v61
    %v1325 = vunpack.c.l.b16 %v62
    %v1326 = vunpack.c.l.b16 %v63
    %v1327 = vunpack.c.l.b16 %v64
    %v1328 = vunpack.c.l.b16 %v65
    %v1329 = vunpack.c.l.b16 %v66
    %v1330 = vunpack.c.l.b16 %v67
    %v1331 = vunpack.c.l.b16 %v68
    %v1332 = vunpack.c.l.b16 %v69
    %v1333 = vunpack.c.l.b16 %v70
    %v1334 = vunpack.c.l.b16 %v71
    %v1335 = vunpack.c.l.b16 %v72
    %v1336 = vunpack.c.l.b16 %v73
    %v1337 = vunpack.c.l.b16 %v74
    %v1338 = vunpack.c.l.b16 %v75
    %v1339 = vunpack.c.l.b16 %v76
    %v1340 = vunpack.c.l.b16 %v77
    %v1341 = vunpack.c.l.b16 %v78
    %v1342 = vunpack.c.l.b16 %v79
    %v1343 = vunpack.c.l.b16 %v80
    %v1344 = vunpack.c.l.b16 %v81
    %v1345 = vunpack.c.l.b16 %v82
    %v1346 = vunpack.c.l.b16 %v83
    %v1347 = vunpack.c.l.b16 %v84
    %v1348 = vunpack.c.l.b16 %v85
    %v1349 = vunpack.c.l.b16 %v86
    %v1350 = vunpack.c.l.b16 %v87
    %v1351 = vunpack.c.l.b16 %v88
    %v1352 = vunpack.c.l.b16 %v89
    %v1353 = vunpack.c.l.b16 %v90
    %v1354 = vunpack.c.l.b16 %v91
    %v1355 = vunpack.c.l.b16 %v92
    %v1356 = vunpack.c.l.b16 %v93
    %v1357 = vunpack.c.l.b16 %v94
    %v1358 = vunpack.c.l.b16 %v95
    %v1359 = vunpack.c.l.b16 %v96
    %v1360 = vunpack.c.l.b16 %v97
    %v1361 = vunpack.c.l.b16 %v98
    %v1362 = vunpack.c.l.b16 %v99
    %v1363 = vunpack.c.l.b16 %v100
    %v1364 = vunpack.c.l.b16 %v101
    %v1365 = vunpack.c.l.b16 %v102
    %v1366 = vunpack.c.l.b16 %v103
    %v1367 = vunpack.c.l.b16 %v104
    %v1368 = vunpack.c.l.b16 %v105
    %v1369 = vunpack.c.l.b16 %v106
    %v1370 = vunpack.c.l.b16 %v107
    %v1371 = vunpack.c.l.b16 %v108
    %v1372 = vunpack.c.l.b16 %v109
    %v1373 = vunpack.c.l.b16 %v110
    %v1374 = vunpack.c.l.b16 %v111
    %v1375 = vunpack.c.l.b16 %v112
    %v1376 = vunpack.c.l.b16 %v113
    %v1377 = vunpack.c.l.b16 %v114
    %v1378 = vunpack.c.l.b16 %v115
    %v1379 = vunpack.c.l.b16 %v116
    %v1380 = vunpack.c.l.b16 %v117
    %v1381 = vunpack.c.l.b16 %v118
    %v1382 = vunpack.c.l.b16 %v119
    %v1383 = vunpack.c.l.b16 %v120
    %v1384 = vunpack.c.l.b16 %v121
    %v1385 = vunpack.c.l.b16 %v122
    %v1386 = vunpack.c.l.b16 %v123
    %v1387 = vunpack.c.l.b16 %v124
    %v1388 = vunpack.c.l.b16 %v125
    %v1389 = vunpack.c.l.b16 %v126
    %v1390 = vunpack.c.l.b16 %v127
    %v1391 = vunpack.c.l.b16 %v128
    %v1392 = vunpack.c.l.b16 %v129
    %v1393 = vunpack.c.l.b16 %v130
    %v1394 = vunpack.c.l.b16 %v131
    %v1395 = vunpack.c.l.b16 %v132
    %v1396 = vunpack.c.l.b16 %v133
    %v1397 = vunpack.c.l.b16 %v134
    %v1398 = vunpack.c.l.b16 %v135
    %v1399 = vunpack.c.l.b16 %v136
    %v1400 = vunpack.c.l.b16 %v137
    %v1401 = vunpack.c.l.b16 %v138
    %v1402 = vunpack.c.l.b16 %v139
    %v1403 = vunpack.c.l.b16 %v140
    %v1404 = vunpack.c.l.b16 %v141
    %v1405 = vunpack.c.l.b16 %v142
    %v1406 = vunpack.c.l.b16 %v143
    %v1407 = vunpack.c.l.b16 %v144
    %v1408 = vunpack.c.l.b16 %v145
    %v1409 = vunpack.c.l.b16 %v146
    %v1410 = vunpack.c.l.b16 %v147
    %v1411 = vunpack.c.l.b16 %v148
    %v1412 = vunpack.c.l.b16 %v149
    %v1413 = vunpack.c.l.b16 %v150
    %v1414 = vunpack.c.l.b16 %v151
    %v1415 = vunpack.c.l.b16 %v152
    %v1416 = vunpack.c.l.b16 %v153
    %v1417 = vunpack.c.l.b16 %v154
    %v1418 = vunpack.c.l.b16 %v155
    %v1419 = vunpack.c.l.b16 %v156
    %v1420 = vunpack.c.l.b16 %v157
    %v1421 = vunpack.c.l.b16 %v158
    %v1422 = vunpack.c.l.b16 %v159
    %v1423 = vunpack.c.l.b16 %v160
    %v1424 = vunpack.c.l.b16 %v161
    %v1425 = vunpack.c.l.b16 %v162
    %v1426 = vunpack.c.l.b16 %v163
    %v1427 = vunpack.c.l.b16 %v164
    %v1428 = vunpack.c.l.b16 %v165
    %v1429 = vunpack.c.l.b16 %v166
    %v1430 = vunpack.c.l.b16 %v167
    %v1431 = vunpack.c.l.b16 %v168
    %v1432 = vunpack.c.l.b16 %v169
    %v1433 = vunpack.c.l.b16 %v170
    %v1434 = vunpack.c.l.b16 %v171
    %v1435 = vunpack.c.l.b16 %v172
    %v1436 = vunpack.c.l.b16 %v173
    %v1437 = vunpack.c.l.b16 %v174
    %v1438 = vunpack.c.l.b16 %v175
    %v1439 = vunpack.c.l.b16 %v176
    %v1440 = vunpack.c.l.b16 %v177
    %v1441 = vunpack.c.l.b16 %v178
    %v1442 = vunpack.c.l.b16 %v179
    %v1443 = vunpack.c.l.b16 %v180
    %v1444 = vunpack.c.l.b16 %v181
    %v1445 = vunpack.c.l.b16 %v182
    %v1446 = vunpack.c.l.b16 %v183
    %v1447 = vunpack.c.l.b16 %v184
    %v1448 = vunpack.c.l.b16 %v185
    %v1449 = vunpack.c.l.b16 %v186
    %v1450 = vunpack.c.l.b16 %v187
    %v1451 = vunpack.c.l.b16 %v188
    %v1452 = vunpack.c.l.b16 %v189
    %v1453 = vunpack.c.l.b16 %v190
    %v1454 = vunpack.c.l.b16 %v191
    %v1455 = vunpack.c.l.b16 %v192
    %v1456 = vunpack.c.l.b16 %v193
    %v1457 = vunpack.c.l.b16 %v194
    %v1458 = vunpack.c.l.b16 %v195
    %v1459 = vunpack.c.l.b16 %v196
    %v1460 = vunpack.c.l.b16 %v197
    %v1461 = vunpack.c.l.b16 %v198
    %v1462 = vunpack.c.l.b16 %v199
    %v1463 = vunpack.c.l.b16 %v200
    %v1464 = vunpack.c.l.b16 %v201
    %v1465 = vunpack.c.l.b16 %v202
    %v1466 = vunpack.c.l.b16 %v203
    %v1467 = vunpack.c.l.b16 %v204
    %v1468 = vunpack.c.l.b16 %v205
    %v1469 = vunpack.c.l.b16 %v206
    %v1470 = vunpack.c.l.b16 %v207
    %v1471 = vunpack.c.l.b16 %v208
    %v1472 = vunpack.c.l.b16 %v209
    %v1473 = vunpack.c.l.b16 %v210
    %v1474 = vunpack.c.l.b16 %v211
    %v1475 = vunpack.c.l.b16 %v212
    %v1476 = vunpack.c.l.b16 %v213
    %v1477 = vunpack.c.l.b16 %v214
    %v1478 = vunpack.c.l.b16 %v215
    %v1479 = vunpack.c.l.b16 %v216
    %v1480 = vunpack.c.l.b16 %v217
    %v1481 = vunpack.c.l.b16 %v218
    %v1482 = vunpack.c.l.b16 %v219
    %v1483 = vunpack.c.l.b16 %v220
    %v1484 = vunpack.c.l.b16 %v221
    %v1485 = vunpack.c.l.b16 %v222
    %v1486 = vunpack.c.l.b16 %v223
    %v1487 = vunpack.c.l.b16 %v224
    %v1488 = vunpack.c.l.b16 %v225
    %v1489 = vunpack.c.l.b16 %v226
    %v1490 = vunpack.c.l.b16 %v227
    %v1491 = vunpack.c.l.b16 %v228
    %v1492 = vunpack.c.l.b16 %v229
    %v1493 = vunpack.c.l.b16 %v230
    %v1494 = vunpack.c.l.b16 %v231
    %v1495 = vunpack.c.l.b16 %v232
    %v1496 = vunpack.c.l.b16 %v233
    %v1497 = vunpack.c.l.b16 %v234
    %v1498 = vunpack.c.l.b16 %v235
    %v1499 = vunpack.c.l.b16 %v236
    %v1500 = vunpack.c.l.b16 %v237
    %v1501 = vunpack.c.l.b16 %v238
    %v1502 = vunpack.c.l.b16 %v239
    %v1503 = vunpack.c.l.b16 %v240
    %v1504 = vunpack.c.l.b16 %v241
    %v1505 = vunpack.c.l.b16 %v242
    %v1506 = vunpack.c.l.b16 %v243
    %v1507 = vunpack.c.l.b16 %v244
    %v1508 = vunpack.c.l.b16 %v245
    %v1509 = vunpack.c.l.b16 %v246
    %v1510 = vunpack.c.l.b16 %v247
    %v1511 = vunpack.c.l.b16 %v248
    %v1512 = vunpack.c.l.b16 %v249
    %v1513 = vunpack.c.l.b16 %v250
    %v1514 = vunpack.c.l.b16 %v251
    %v1515 = vunpack.c.l.b16 %v252
    %v1516 = vunpack.c.l.b16 %v253
    %v1517 = vunpack.c.l.b16 %v254
    %v1518 = vunpack.c.l.b16 %v255
    %v1519 = vunpack.c.l.b16 %v256
    %v1520 = vunpack.c.l.b16 %v257
    %v1521 = vunpack.c.l.b16 %v258
    %v1522 = vunpack.c.l.b16 %v259
    %v1523 = vunpack.c.l.b16 %v260
    %v1524 = vunpack.c.l.b16 %v261
    %v1525 = vunpack.c.l.b16 %v262
    %v1526 = vunpack.c.l.b16 %v263
    %v1527 = vunpack.c.l.b16 %v264
    %v1528 = vunpack.c.l.b16 %v265
    %v1529 = vunpack.c.l.b16 %v266
    %v1530 = vunpack.c.l.b16 %v267
    %v1531 = vunpack.c.l.b16 %v268
    %v1532 = vunpack.c.l.b16 %v269
    %v1533 = vunpack.c.l.b16 %v270
    %v1534 = vunpack.c.l.b16 %v271
    %v1535 = vunpack.c.l.b16 %v272
    %v1536 = vunpack.c.l.b16 %v273
    %v1537 = vunpack.c.l.b16 %v274
    %v1538 = vunpack.c.l.b16 %v275
    %v1539 = vunpack.c.l.b16 %v276
    %v1540 = vunpack.c.l.b16 %v277
    %v1541 = vunpack.c.l.b16 %v278
    %v1542 = vunpack.c.l.b16 %v279
    %v1543 = vunpack.c.l.b16 %v280
    %v1544 = vunpack.c.l.b16 %v281
    %v1545 = vunpack.c.l.b16 %v282
    %v1546 = vunpack.c.l.b16 %v283
    %v1547 = vunpack.c.l.b16 %v284
    %v1548 = vunpack.c.l.b16 %v285
    %v1549 = vunpack.c.l.b16 %v286
    %v1550 = vunpack.c.l.b16 %v287
    %v1551 = vunpack.c.l.b16 %v288
    %v1552 = vunpack.c.l.b16 %v289
    %v1553 = vunpack.c.l.b16 %v290
    %v1554 = vunpack.c.l.b16 %v291
    %v1555 = vunpack.c.l.b16 %v292
    %v1556 = vunpack.c.l.b16 %v293
    %v1557 = vunpack.c.l.b16 %v294
    %v1558 = vunpack.c.l.b16 %v295
    %v1559 = vunpack.c.l.b16 %v296
    %v1560 = vunpack.c.l.b16 %v297
    %v1561 = vunpack.c.l.b16 %v298
    %v1562 = vunpack.c.l.b16 %v299
    %v1563 = vunpack.c.l.b16 %v300
    %v1564 = vunpack.c.l.b16 %v301
    %v1565 = vunpack.c.l.b16 %v302
    %v1566 = vunpack.c.l.b16 %v303
    %v1567 = vunpack.c.l.b16 %v304
    %v1568 = vunpack.c.l.b16 %v305
    %v1569 = vunpack.c.l.b16 %v306
    %v1570 = vunpack.c.l.b16 %v307
    %v1571 = vunpack.c.l.b16 %v308
    %v1572 = vunpack.c.l.b16 %v309
    %v1573 = vunpack.c.l.b16 %v310
    %v1574 = vunpack.c.l.b16 %v311
    %v1575 = vunpack.c.l.b16 %v312
    %v1576 = vunpack.c.l.b16 %v313
    %v1577 = vunpack.c.l.b16 %v314
    %v1578 = vunpack.c.l.b16 %v315
    %v1579 = vunpack.c.l.b16 %v316
    %v1580 = vunpack.c.l.b16 %v317
    %v1581 = vunpack.c.l.b16 %v318
    %v1582 = vunpack.c.l.b16 %v319
    %v1583 = vunpack.c.l.b16 %v320
    %v1584 = vunpack.c.l.b16 %v321
    %v1585 = vunpack.c.l.b16 %v322
    %v1586 = vunpack.c.l.b16 %v323
    %v1587 = vunpack.c.l.b16 %v324
    %v1588 = vunpack.c.l.b16 %v325
    %v1589 = vunpack.c.l.b16 %v326
    %v1590 = vunpack.c.l.b16 %v327
    %v1591 = vunpack.c.l.b16 %v328
    %v1592 = vunpack.c.l.b16 %v329
    %v1593 = vunpack.c.l.b16 %v330
    %v1594 = vunpack.c.l.b16 %v331
    %v1595 = vunpack.c.l.b16 %v332
    %v1596 = vunpack.c.l.b16 %v333
    %v1597 = vunpack.c.l.b16 %v334
    %v1598 = vunpack.c.l.b16 %v335
    %v1599 = vunpack.c.l.b16 %v336
    %v1600 = vunpack.c.l.b16 %v337
    %v1601 = vunpack.c.l.b16 %v338
    %v1602 = vunpack.c.l.b16 %v339
    %v1603 = vunpack.c.l.b16 %v340
    %v1604 = vunpack.c.l.b16 %v341
    %v1605 = vunpack.c.l.b16 %v342
    %v1606 = vunpack.c.l.b16 %v343
    %v1607 = vunpack.c.l.b16 %v344
    %v1608 = vunpack.c.l.b16 %v345
    %v1609 = vunpack.c.l.b16 %v346
    %v1610 = vunpack.c.l.b16 %v347
    %v1611 = vunpack.c.l.b16 %v348
    %v1612 = vunpack.c.l.b16 %v349
    %v1613 = vunpack.c.l.b16 %v350
    %v1614 = vunpack.c.l.b16 %v351
    %v1615 = vunpack.c.l.b16 %v352
    %v1616 = vunpack.c.l.b16 %v353
    %v1617 = vunpack.c.l.b16 %v354
    %v1618 = vunpack.c.l.b16 %v355
    %v1619 = vunpack.c.l.b16 %v356
    %v1620 = vunpack.c.l.b16 %v357
    %v1621 = vunpack.c.l.b16 %v358
    %v1622 = vunpack.c.l.b16 %v359
    %v1623 = vunpack.c.l.b16 %v360
    %v1624 = vunpack.c.l.b16 %v361
    %v1625 = vunpack.c.l.b16 %v362
    %v1626 = vunpack.c.l.b16 %v363
    %v1627 = vunpack.c.l.b16 %v364
    %v1628 = vunpack.c.l.b16 %v365
    %v1629 = vunpack.c.l.b16 %v366
    %v1630 = vunpack.c.l.b16 %v367
    %v1631 = vunpack.c.l.b16 %v368
    %v1632 = vunpack.c.l.b16 %v369
    %v1633 = vunpack.c.l.b16 %v370
    %v1634 = vunpack.c.l.b16 %v371
    %v1635 = vunpack.c.l.b16 %v372
    %v1636 = vunpack.c.l.b16 %v373
    %v1637 = vunpack.c.l.b16 %v374
    %v1638 = vunpack.c.l.b16 %v375
    %v1639 = vunpack.c.l.b16 %v376
    %v1640 = vunpack.c.l.b16 %v377
    %v1641 = vunpack.c.l.b16 %v378
    %v1642 = vunpack.c.l.b16 %v379
    %v1643 = vunpack.c.l.b16 %v380
    %v1644 = vunpack.c.l.b16 %v381
    %v1645 = vunpack.c.l.b16 %v382
    %v1646 = vunpack.c.l.b16 %v383
    %v1647 = vunpack.c.l.b16 %v384
    %v1648 = vunpack.c.l.b16 %v385
    %v1649 = vunpack.c.l.b16 %v386
    %v1650 = vunpack.c.l.b16 %v387
    %v1651 = vunpack.c.l.b16 %v388
    %v1652 = vunpack.c.l.b16 %v389
    %v1653 = vunpack.c.l.b16 %v390
    %v1654 = vunpack.c.l.b16 %v391
    %v1655 = vunpack.c.l.b16 %v392
    %v1656 = vunpack.c.l.b16 %v393
    %v1657 = vunpack.c.l.b16 %v394
    %v1658 = vunpack.c.l.b16 %v395
    %v1659 = vunpack.c.l.b16 %v396
    %v1660 = vunpack.c.l.b16 %v397
    %v1661 = vunpack.c.l.b16 %v398
    %v1662 = vunpack.c.l.b16 %v399
    %v1663 = vunpack.c.l.b16 %v400
    %v1664 = vunpack.c.l.b16 %v401
    %v1665 = vunpack.c.l.b16 %v402
    %v1666 = vunpack.c.l.b16 %v403
    %v1667 = vunpack.c.l.b16 %v404
    %v1668 = vunpack.c.l.b16 %v405
    %v1669 = vunpack.c.l.b16 %v406
    %v1670 = vunpack.c.l.b16 %v407
    %v1671 = vunpack.c.l.b16 %v408
    %v1672 = vunpack.c.l.b16 %v409
    %v1673 = vunpack.c.l.b16 %v410
    %v1674 = vunpack.c.l.b16 %v411
    %v1675 = vunpack.c.l.b16 %v412
    %v1676 = vunpack.c.l.b16 %v413
    %v1677 = vunpack.c.l.b16 %v414
    %v1678 = vunpack.c.l.b16 %v415
    %v1679 = vunpack.c.l.b16 %v416
    %v1680 = vunpack.c.l.b16 %v417
    %v1681 = vunpack.c.l.b16 %v418
    %v1682 = vunpack.c.l.b16 %v419
    %v1683 = vunpack.c.l.b16 %v420
    %v1684 = vunpack.c.l.b16 %v421
    %v1685 = vunpack.c.l.b16 %v422
    %v1686 = vunpack.c.l.b16 %v423
    %v1687 = vunpack.c.l.b16 %v424
    %v1688 = vunpack.c.l.b16 %v425
    %v1689 = vunpack.c.l.b16 %v426
    %v1690 = vunpack.c.l.b16 %v427
    %v1691 = vunpack.c.l.b16 %v428
    %v1692 = vunpack.c.l.b16 %v429
    %v1693 = vunpack.c.l.b16 %v430
    %v1694 = vunpack.c.l.b16 %v431
    %v1695 = vunpack.c.l.b16 %v432
    %v1696 = vunpack.c.l.b16 %v433
    %v1697 = vunpack.c.l.b16 %v434
    %v1698 = vunpack.c.l.b16 %v435
    %v1699 = vunpack.c.l.b16 %v436
    %v1700 = vunpack.c.l.b16 %v437
    %v1701 = vunpack.c.l.b16 %v438
    %v1702 = vunpack.c.l.b16 %v439
    %v1703 = vunpack.c.l.b16 %v440
    %v1704 = vunpack.c.l.b16 %v441
    %v1705 = vunpack.c.l.b16 %v442
    %v1706 = vunpack.c.l.b16 %v443
    %v1707 = vunpack.c.l.b16 %v444
    %v1708 = vunpack.c.l.b16 %v445
    %v1709 = vunpack.c.l.b16 %v446
    %v1710 = vunpack.c.l.b16 %v447
    %v1711 = vunpack.c.l.b16 %v448
    %v1712 = vunpack.c.l.b16 %v449
    %v1713 = vunpack.c.l.b16 %v450
    %v1714 = vunpack.c.l.b16 %v451
    %v1715 = vunpack.c.l.b16 %v452
    %v1716 = vunpack.c.l.b16 %v453
    %v1717 = vunpack.c.l.b16 %v454
    %v1718 = vunpack.c.l.b16 %v455
    %v1719 = vunpack.c.l.b16 %v456
    %v1720 = vunpack.c.l.b16 %v457
    %v1721 = vunpack.c.l.b16 %v458
    %v1722 = vunpack.c.l.b16 %v459
    %v1723 = vunpack.c.l.b16 %v460
    %v1724 = vunpack.c.l.b16 %v461
    %v1725 = vunpack.c.l.b16 %v462
    %v1726 = vunpack.c.l.b16 %v463
    %v1727 = vunpack.c.l.b16 %v464
    %v1728 = vunpack.c.l.b16 %v465
    %v1729 = vunpack.c.l.b16 %v466
    %v1730 = vunpack.c.l.b16 %v467
    %v1731 = vunpack.c.l.b16 %v468
    %v1732 = vunpack.c.l.b16 %v469
    %v1733 = vunpack.c.l.b16 %v470
    %v1734 = vunpack.c.l.b16 %v471
    %v1735 = vunpack.c.l.b16 %v472
    %v1736 = vunpack.c.l.b16 %v473
    %v1737 = vunpack.c.l.b16 %v474
    %v1738 = vunpack.c.l.b16 %v475
    %v1739 = vunpack.c.l.b16 %v476
    %v1740 = vunpack.c.l.b16 %v477
    %v1741 = vunpack.c.l.b16 %v478
    %v1742 = vunpack.c.l.b16 %v479
    %v1743 = vunpack.c.l.b16 %v480
    %v1744 = vunpack.c.l.b16 %v481
    %v1745 = vunpack.c.l.b16 %v482
    %v1746 = vunpack.c.l.b16 %v483
    %v1747 = vunpack.c.l.b16 %v484
    %v1748 = vunpack.c.l.b16 %v485
    %v1749 = vunpack.c.l.b16 %v486
    %v1750 = vunpack.c.l.b16 %v487
    %v1751 = vunpack.c.l.b16 %v488
    %v1752 = vunpack.c.l.b16 %v489
    %v1753 = vunpack.c.l.b16 %v490
    %v1754 = vunpack.c.l.b16 %v491
    %v1755 = vunpack.c.l.b16 %v492
    %v1756 = vunpack.c.l.b16 %v493
    %v1757 = vunpack.c.l.b16 %v494
    %v1758 = vunpack.c.l.b16 %v495
    %v1759 = vunpack.c.l.b16 %v496
    %v1760 = vunpack.c.l.b16 %v497
    %v1761 = vunpack.c.l.b16 %v498
    %v1762 = vunpack.c.l.b16 %v499
    %v1763 = vunpack.c.l.b16 %v500
    %v1764 = vunpack.c.l.b16 %v501
    %v1765 = vunpack.c.l.b16 %v502
    %v1766 = vunpack.c.l.b16 %v503
    %v1767 = vunpack.c.l.b16 %v504
    %v1768 = vunpack.c.l.b16 %v505
    %v1769 = vunpack.c.l.b16 %v506
    %v1770 = vunpack.c.l.b16 %v507
    %v1771 = vunpack.c.l.b16 %v508
    %v1772 = vunpack.c.l.b16 %v509
    %v1773 = vunpack.c.l.b16 %v510
    %v1774 = vunpack.c.l.b16 %v511
    %v1775 = vunpack.c.l.b16 %v512
    %v1776 = vunpack.c.l.b16 %v513
    %v1777 = vunpack.c.l.b16 %v514
    %v1778 = vunpack.c.l.b16 %v515
    %v1779 = vunpack.c.l.b16 %v516
    %v1780 = vunpack.c.l.b16 %v517
    %v1781 = vunpack.c.l.b16 %v518
    %v1782 = vunpack.c.l.b16 %v519
    %v1783 = vunpack.c.l.b16 %v520
    %v1784 = vunpack.c.l.b16 %v521
    %v1785 = vunpack.c.l.b16 %v522
    %v1786 = vunpack.c.l.b16 %v523
    %v1787 = vunpack.c.l.b16 %v524
    %v1788 = vunpack.c.l.b16 %v525
    %v1789 = vunpack.c.l.b16 %v526
    %v1790 = vunpack.c.l.b16 %v527
    %v1791 = vunpack.c.l.b16 %v528
    %v1792 = vunpack.c.l.b16 %v529
    %v1793 = vunpack.c.l.b16 %v530
    %v1794 = vunpack.c.l.b16 %v531
    %v1795 = vunpack.c.l.b16 %v532
    %v1796 = vunpack.c.l.b16 %v533
    %v1797 = vunpack.c.l.b16 %v534
    %v1798 = vunpack.c.l.b16 %v535
    %v1799 = vunpack.c.l.b16 %v536
    %v1800 = vunpack.c.l.b16 %v537
    %v1801 = vunpack.c.l.b16 %v538
    %v1802 = vunpack.c.l.b16 %v539
    %v1803 = vunpack.c.l.b16 %v540
    %v1804 = vunpack.c.l.b16 %v541
    %v1805 = vunpack.c.l.b16 %v542
    %v1806 = vunpack.c.l.b16 %v543
    %v1807 = vunpack.c.l.b16 %v544
    %v1808 = vunpack.c.l.b16 %v545
    %v1809 = vunpack.c.l.b16 %v546
    %v1810 = vunpack.c.l.b16 %v547
    %v1811 = vunpack.c.l.b16 %v548
    %v1812 = vunpack.c.l.b16 %v549
    %v1813 = vunpack.c.l.b16 %v550
    %v1814 = vunpack.c.l.b16 %v551
    %v1815 = vunpack.c.l.b16 %v552
    %v1816 = vunpack.c.l.b16 %v553
    %v1817 = vunpack.c.l.b16 %v554
    %v1818 = vunpack.c.l.b16 %v555
    %v1819 = vunpack.c.l.b16 %v556
    %v1820 = vunpack.c.l.b16 %v557
    %v1821 = vunpack.c.l.b16 %v558
    %v1822 = vunpack.c.l.b16 %v559
    %v1823 = vunpack.c.l.b16 %v560
    %v1824 = vunpack.c.l.b16 %v561
    %v1825 = vunpack.c.l.b16 %v562
    %v1826 = vunpack.c.l.b16 %v563
    %v1827 = vunpack.c.l.b16 %v564
    %v1828 = vunpack.c.l.b16 %v565
    %v1829 = vunpack.c.l.b16 %v566
    %v1830 = vunpack.c.l.b16 %v567
    %v1831 = vunpack.c.l.b16 %v568
    %v1832 = vunpack.c.l.b16 %v569
    %v1833 = vunpack.c.l.b16 %v570
    %v1834 = vunpack.c.l.b16 %v571
    %v1835 = vunpack.c.l.b16 %v572
    %v1836 = vunpack.c.l.b16 %v573
    %v1837 = vunpack.c.l.b16 %v574
    %v1838 = vunpack.c.l.b16 %v575
    %v1839 = vunpack.c.l.b16 %v576
    %v1840 = vunpack.c.l.b16 %v577
    %v1841 = vunpack.c.l.b16 %v578
    %v1842 = vunpack.c.l.b16 %v579
    %v1843 = vunpack.c.l.b16 %v580
    %v1844 = vunpack.c.l.b16 %v581
    %v1845 = vunpack.c.l.b16 %v582
    %v1846 = vunpack.c.l.b16 %v583
    %v1847 = vunpack.c.l.b16 %v584
    %v1848 = vunpack.c.l.b16 %v585
    %v1849 = vunpack.c.l.b16 %v586
    %v1850 = vunpack.c.l.b16 %v587
    %v1851 = vunpack.c.l.b16 %v588
    %v1852 = vunpack.c.l.b16 %v589
    %v1853 = vunpack.c.l.b16 %v590
    %v1854 = vunpack.c.l.b16 %v591
    %v1855 = vunpack.c.l.b16 %v592
    %v1856 = vunpack.c.l.b16 %v593
    %v1857 = vunpack.c.l.b16 %v594
    %v1858 = vunpack.c.l.b16 %v595
    %v1859 = vunpack.c.l.b16 %v596
    %v1860 = vunpack.c.l.b16 %v597
    %v1861 = vunpack.c.l.b16 %v598
    %v1862 = vunpack.c.l.b16 %v599
    %v1863 = vunpack.c.l.b16 %v600
    %v1864 = vunpack.c.l.b16 %v601
    %v1865 = vunpack.c.l.b16 %v602
    %v1866 = vunpack.c.l.b16 %v603
    %v1867 = vunpack.c.l.b16 %v604
    %v1868 = vunpack.c.l.b16 %v605
    %v1869 = vunpack.c.l.b16 %v606
    %v1870 = vunpack.c.l.b16 %v607
    %v1871 = vunpack.c.l.b16 %v608
    %v1872 = vunpack.c.l.b16 %v609
    %v1873 = vunpack.c.l.b16 %v610
    %v1874 = vunpack.c.l.b16 %v611
    %v1875 = vunpack.c.l.b16 %v612
    %v1876 = vunpack.c.l.b16 %v613
    %v1877 = vunpack.c.l.b16 %v614
    %v1878 = vpack.c.b16 %v1291, %v1290
    %v1879 = vpack.c.b16 %v1293, %v1292
    %v1880 = vpack.c.b16 %v1295, %v1294
    %v1881 = vpack.c.b16 %v1297, %v1296
    %v1882 = vpack.c.b16 %v1299, %v1298
    %v1883 = vpack.c.b16 %v1301, %v1300
    %v1884 = vpack.c.b16 %v1303, %v1302
    %v1885 = vpack.c.b16 %v1305, %v1304
    %v1886 = vpack.c.b16 %v1307, %v1306
    %v1887 = vpack.c.b16 %v1309, %v1308
    %v1888 = vpack.c.b16 %v1311, %v1310
    %v1889 = vpack.c.b16 %v1313, %v1312
    %v1890 = vpack.c.b16 %v1315, %v1314
    %v1891 = vpack.c.b16 %v1317, %v1316
    %v1892 = vpack.c.b16 %v1319, %v1318
    %v1893 = vpack.c.b16 %v1321, %v1320
    %v1894 = vpack.c.b16 %v1323, %v1322
    %v1895 = vpack.c.b16 %v1325, %v1324
    %v1896 = vpack.c.b16 %v1327, %v1326
    %v1897 = vpack.c.b16 %v1329, %v1328
    %v1898 = vpack.c.b16 %v1331, %v1330
    %v1899 = vpack.c.b16 %v1333, %v1332
    %v1900 = vpack.c.b16 %v1335, %v1334
    %v1901 = vpack.c.b16 %v1337, %v1336
    %v1902 = vpack.c.b16 %v1339, %v1338
    %v1903 = vpack.c.b16 %v1341, %v1340
    %v1904 = vpack.c.b16 %v1343, %v1342
    %v1905 = vpack.c.b16 %v1345, %v1344
    %v1906 = vpack.c.b16 %v1347, %v1346
    %v1907 = vpack.c.b16 %v1349, %v1348
    %v1908 = vpack.c.b16 %v1351, %v1350
    %v1909 = vpack.c.b16 %v1353, %v1352
    %v1910 = vpack.c.b16 %v1355, %v1354
    %v1911 = vpack.c.b16 %v1357, %v1356
    %v1912 = vpack.c.b16 %v1359, %v1358
    %v1913 = vpack.c.b16 %v1361, %v1360
    %v1914 = vpack.c.b16 %v1363, %v1362
    %v1915 = vpack.c.b16 %v1365, %v1364
    %v1916 = vpack.c.b16 %v1367, %v1366
    %v1917 = vpack.c.b16 %v1369, %v1368
    %v1918 = vpack.c.b16 %v1371, %v1370
    %v1919 = vpack.c.b16 %v1373, %v1372
    %v1920 = vpack.c.b16 %v1375, %v1374
    %v1921 = vpack.c.b16 %v1377, %v1376
    %v1922 = vpack.c.b16 %v1379, %v1378
    %v1923 = vpack.c.b16 %v1381, %v1380
    %v1924 = vpack.c.b16 %v1383, %v1382
    %v1925 = vpack.c.b16 %v1385, %v1384
    %v1926 = vpack.c.b16 %v1387, %v1386
    %v1927 = vpack.c.b16 %v1389, %v1388
    %v1928 = vpack.c.b16 %v1391, %v1390
    %v1929 = vpack.c.b16 %v1393, %v1392
    %v1930 = vpack.c.b16 %v1395, %v1394
    %v1931 = vpack.c.b16 %v1397, %v1396
    %v1932 = vpack.c.b16 %v1399, %v1398
    %v1933 = vpack.c.b16 %v1401, %v1400
    %v1934 = vpack.c.b16 %v1403, %v1402
    %v1935 = vpack.c.b16 %v1405, %v1404
    %v1936 = vpack.c.b16 %v1407, %v1406
    %v1937 = vpack.c.b16 %v1409, %v1408
    %v1938 = vpack.c.b16 %v1411, %v1410
    %v1939 = vpack.c.b16 %v1413, %v1412
    %v1940 = vpack.c.b16 %v1415, %v1414
    %v1941 = vpack.c.b16 %v1417, %v1416
    %v1942 = vpack.c.b16 %v1419, %v1418
    %v1943 = vpack.c.b16 %v1421, %v1420
    %v1944 = vpack.c.b16 %v1423, %v1422
    %v1945 = vpack.c.b16 %v1425, %v1424
    %v1946 = vpack.c.b16 %v1427, %v1426
    %v1947 = vpack.c.b16 %v1429, %v1428
    %v1948 = vpack.c.b16 %v1431, %v1430
    %v1949 = vpack.c.b16 %v1433, %v1432
    %v1950 = vpack.c.b16 %v1435, %v1434
    %v1951 = vpack.c.b16 %v1437, %v1436
    %v1952 = vpack.c.b16 %v1439, %v1438
    %v1953 = vpack.c.b16 %v1441, %v1440
    %v1954 = vpack.c.b16 %v1443, %v1442
    %v1955 = vpack.c.b16 %v1445, %v1444
    %v1956 = vpack.c.b16 %v1447, %v1446
    %v1957 = vpack.c.b16 %v1449, %v1448
    %v1958 = vpack.c.b16 %v1451, %v1450
    %v1959 = vpack.c.b16 %v1453, %v1452
    %v1960 = vpack.c.b16 %v1455, %v1454
    %v1961 = vpack.c.b16 %v1457, %v1456
    %v1962 = vpack.c.b16 %v1459, %v1458
    %v1963 = vpack.c.b16 %v1461, %v1460
    %v1964 = vpack.c.b16 %v1463, %v1462
    %v1965 = vpack.c.b16 %v1465, %v1464
    %v1966 = vpack.c.b16 %v1467, %v1466
    %v1967 = vpack.c.b16 %v1469, %v1468
    %v1968 = vpack.c.b16 %v1471, %v1470
    %v1969 = vpack.c.b16 %v1473, %v1472
    %v1970 = vpack.c.b16 %v1475, %v1474
    %v1971 = vpack.c.b16 %v1477, %v1476
    %v1972 = vpack.c.b16 %v1479, %v1478
    %v1973 = vpack.c.b16 %v1481, %v1480
    %v1974 = vpack.c.b16 %v1483, %v1482
    %v1975 = vpack.c.b16 %v1485, %v1484
    %v1976 = vpack.c.b16 %v1487, %v1486
    %v1977 = vpack.c.b16 %v1489, %v1488
    %v1978 = vpack.c.b16 %v1491, %v1490
    %v1979 = vpack.c.b16 %v1493, %v1492
    %v1980 = vpack.c.b16 %v1495, %v1494
    %v1981 = vpack.c.b16 %v1497, %v1496
    %v1982 = vpack.c.b16 %v1499, %v1498
    %v1983 = vpack.c.b16 %v1501, %v1500
    %v1984 = vpack.c.b16 %v1503, %v1502
    %v1985 = vpack.c.b16 %v1505, %v1504
    %v1986 = vpack.c.b16 %v1507, %v1506
    %v1987 = vpack.c.b16 %v1509, %v1508
    %v1988 = vpack.c.b16 %v1511, %v1510
    %v1989 = vpack.c.b16 %v1513, %v1512
    %v1990 = vpack.c.b16 %v1515, %v1514
    %v1991 = vpack.c.b16 %v1517, %v1516
    %v1992 = vpack.c.b16 %v1519, %v1518
    %v1993 = vpack.c.b16 %v1521, %v1520
    %v1994 = vpack.c.b16 %v1523, %v1522
    %v1995 = vpack.c.b16 %v1525, %v1524
    %v1996 = vpack.c.b16 %v1527, %v1526
    %v1997 = vpack.c.b16 %v1529, %v1528
    %v1998 = vpack.c.b16 %v1531, %v1530
    %v1999 = vpack.c.b16 %v1533, %v1532
    %v2000 = vpack.c.b16 %v1535, %v1534
    %v2001 = vpack.c.b16 %v1537, %v1536
    %v2002 = vpack.c.b16 %v1539, %v1538
    %v2003 = vpack.c.b16 %v1541, %v1540
    %v2004 = vpack.c.b16 %v1543, %v1542
    %v2005 = vpack.c.b16 %v1545, %v1544
    %v2006 = vpack.c.b16 %v1547, %v1546
    %v2007 = vpack.c.b16 %v1549, %v1548
    %v2008 = vpack.c.b16 %v1551, %v1550
    %v2009 = vpack.c.b16 %v1553, %v1552
    %v2010 = vpack.c.b16 %v1555, %v1554
    %v2011 = vpack.c.b16 %v1557, %v1556
    %v2012 = vpack.c.b16 %v1559, %v1558
    %v2013 = vpack.c.b16 %v1561, %v1560
    %v2014 = vpack.c.b16 %v1563, %v1562
    %v2015 = vpack.c.b16 %v1565, %v1564
    %v2016 = vpack.c.b16 %v1567, %v1566
    %v2017 = vpack.c.b16 %v1569, %v1568
    %v2018 = vpack.c.b16 %v1571, %v1570
    %v2019 = vpack.c.b16 %v1573, %v1572
    %v2020 = vpack.c.b16 %v1575, %v1574
    %v2021 = vpack.c.b16 %v1577, %v1576
    %v2022 = vpack.c.b16 %v1579, %v1578
    %v2023 = vpack.c.b16 %v1581, %v1580
    %v2024 = vpack.c.b16 %v1583, %v1582
    %v2025 = vpack.c.b16 %v1585, %v1584
    %v2026 = vpack.c.b16 %v1587, %v1586
    %v2027 = vpack.c.b16 %v1589, %v1588
    %v2028 = vpack.c.b16 %v1591, %v1590
    %v2029 = vpack.c.b16 %v1593, %v1592
    %v2030 = vpack.c.b16 %v1595, %v1594
    %v2031 = vpack.c.b16 %v1597, %v1596
    %v2032 = vpack.c.b16 %v1599, %v1598
    %v2033 = vpack.c.b16 %v1601, %v1600
    %v2034 = vpack.c.b16 %v1603, %v1602
    %v2035 = vpack.c.b16 %v1605, %v1604
    %v2036 = vpack.c.b16 %v1607, %v1606
    %v2037 = vpack.c.b16 %v1609, %v1608
    %v2038 = vpack.c.b16 %v1611, %v1610
    %v2039 = vpack.c.b16 %v1613, %v1612
    %v2040 = vpack.c.b16 %v1615, %v1614
    %v2041 = vpack.c.b16 %v1617, %v1616
    %v2042 = vpack.c.b16 %v1619, %v1618
    %v2043 = vpack.c.b16 %v1621, %v1620
    %v2044 = vpack.c.b16 %v1623, %v1622
    %v2045 = vpack.c.b16 %v1625, %v1624
    %v2046 = vpack.c.b16 %v1627, %v1626
    %v2047 = vpack.c.b16 %v1629, %v1628
    %v2048 = vpack.c.b16 %v1631, %v1630
    %v2049 = vpack.c.b16 %v1633, %v1632
    %v2050 = vpack.c.b16 %v1635, %v1634
    %v2051 = vpack.c.b16 %v1637, %v1636
    %v2052 = vpack.c.b16 %v1639, %v1638
    %v2053 = vpack.c.b16 %v1641, %v1640
    %v2054 = vpack.c.b16 %v1643, %v1642
    %v2055 = vpack.c.b16 %v1645, %v1644
    %v2056 = vpack.c.b16 %v1647, %v1646
    %v2057 = vpack.c.b16 %v1649, %v1648
    %v2058 = vpack.c.b16 %v1651, %v1650
    %v2059 = vpack.c.b16 %v1653, %v1652
    %v2060 = vpack.c.b16 %v1655, %v1654
    %v2061 = vpack.c.b16 %v1657, %v1656
    %v2062 = vpack.c.b16 %v1659, %v1658
    %v2063 = vpack.c.b16 %v1661, %v1660
    %v2064 = vpack.c.b16 %v1663, %v1662
    %v2065 = vpack.c.b16 %v1665, %v1664
    %v2066 = vpack.c.b16 %v1667, %v1666
    %v2067 = vpack.c.b16 %v1669, %v1668
    %v2068 = vpack.c.b16 %v1671, %v1670
    %v2069 = vpack.c.b16 %v1673, %v1672
    %v2070 = vpack.c.b16 %v1675, %v1674
    %v2071 = vpack.c.b16 %v1677, %v1676
    %v2072 = vpack.c.b16 %v1679, %v1678
    %v2073 = vpack.c.b16 %v1681, %v1680
    %v2074 = vpack.c.b16 %v1683, %v1682
    %v2075 = vpack.c.b16 %v1685, %v1684
    %v2076 = vpack.c.b16 %v1687, %v1686
    %v2077 = vpack.c.b16 %v1689, %v1688
    %v2078 = vpack.c.b16 %v1691, %v1690
    %v2079 = vpack.c.b16 %v1693, %v1692
    %v2080 = vpack.c.b16 %v1695, %v1694
    %v2081 = vpack.c.b16 %v1697, %v1696
    %v2082 = vpack.c.b16 %v1699, %v1698
    %v2083 = vpack.c.b16 %v1701, %v1700
    %v2084 = vpack.c.b16 %v1703, %v1702
    %v2085 = vpack.c.b16 %v1705, %v1704
    %v2086 = vpack.c.b16 %v1707, %v1706
    %v2087 = vpack.c.b16 %v1709, %v1708
    %v2088 = vpack.c.b16 %v1711, %v1710
    %v2089 = vpack.c.b16 %v1713, %v1712
    %v2090 = vpack.c.b16 %v1715, %v1714
    %v2091 = vpack.c.b16 %v1717, %v1716
    %v2092 = vpack.c.b16 %v1719, %v1718
    %v2093 = vpack.c.b16 %v1721, %v1720
    %v2094 = vpack.c.b16 %v1723, %v1722
    %v2095 = vpack.c.b16 %v1725, %v1724
    %v2096 = vpack.c.b16 %v1727, %v1726
    %v2097 = vpack.c.b16 %v1729, %v1728
    %v2098 = vpack.c.b16 %v1731, %v1730
    %v2099 = vpack.c.b16 %v1733, %v1732
    %v2100 = vpack.c.b16 %v1735, %v1734
    %v2101 = vpack.c.b16 %v1737, %v1736
    %v2102 = vpack.c.b16 %v1739, %v1738
    %v2103 = vpack.c.b16 %v1741, %v1740
    %v2104 = vpack.c.b16 %v1743, %v1742
    %v2105 = vpack.c.b16 %v1745, %v1744
    %v2106 = vpack.c.b16 %v1747, %v1746
    %v2107 = vpack.c.b16 %v1749, %v1748
    %v2108 = vpack.c.b16 %v1751, %v1750
    %v2109 = vpack.c.b16 %v1753, %v1752
    %v2110 = vpack.c.b16 %v1755, %v1754
    %v2111 = vpack.c.b16 %v1757, %v1756
    %v2112 = vpack.c.b16 %v1759, %v1758
    %v2113 = vpack.c.b16 %v1761, %v1760
    %v2114 = vpack.c.b16 %v1763, %v1762
    %v2115 = vpack.c.b16 %v1765, %v1764
    %v2116 = vpack.c.b16 %v1767, %v1766
    %v2117 = vpack.c.b16 %v1769, %v1768
    %v2118 = vpack.c.b16 %v1771, %v1770
    %v2119 = vpack.c.b16 %v1773, %v1772
    %v2120 = vpack.c.b16 %v1775, %v1774
    %v2121 = vpack.c.b16 %v1777, %v1776
    %v2122 = vpack.c.b16 %v1779, %v1778
    %v2123 = vpack.c.b16 %v1781, %v1780
    %v2124 = vpack.c.b16 %v1783, %v1782
    %v2125 = vpack.c.b16 %v1785, %v1784
    %v2126 = vpack.c.b16 %v1787, %v1786
    %v2127 = vpack.c.b16 %v1789, %v1788
    %v2128 = vpack.c.b16 %v1791, %v1790
    %v2129 = vpack.c.b16 %v1793, %v1792
    %v2130 = vpack.c.b16 %v1795, %v1794
    %v2131 = vpack.c.b16 %v1797, %v1796
    %v2132 = vpack.c.b16 %v1799, %v1798
    %v2133 = vpack.c.b16 %v1801, %v1800
    %v2134 = vpack.c.b16 %v1803, %v1802
    %v2135 = vpack.c.b16 %v1805, %v1804
    %v2136 = vpack.c.b16 %v1807, %v1806
    %v2137 = vpack.c.b16 %v1809, %v1808
    %v2138 = vpack.c.b16 %v1811, %v1810
    %v2139 = vpack.c.b16 %v1813, %v1812
    %v2140 = vpack.c.b16 %v1815, %v1814
    %v2141 = vpack.c.b16 %v1817, %v1816
    %v2142 = vpack.c.b16 %v1819, %v1818
    %v2143 = vpack.c.b16 %v1821, %v1820
    %v2144 = vpack.c.b16 %v1823, %v1822
    %v2145 = vpack.c.b16 %v1825, %v1824
    %v2146 = vpack.c.b16 %v1827, %v1826
    %v2147 = vpack.c.b16 %v1829, %v1828
    %v2148 = vpack.c.b16 %v1831, %v1830
    %v2149 = vpack.c.b16 %v1833, %v1832
    %v2150 = vpack.c.b16 %v1835, %v1834
    %v2151 = vpack.c.b16 %v1837, %v1836
    %v2152 = vpack.c.b16 %v1839, %v1838
    %v2153 = vpack.c.b16 %v1841, %v1840
    %v2154 = vpack.c.b16 %v1843, %v1842
    %v2155 = vpack.c.b16 %v1845, %v1844
    %v2156 = vpack.c.b16 %v1847, %v1846
    %v2157 = vpack.c.b16 %v1849, %v1848
    %v2158 = vpack.c.b16 %v1851, %v1850
    %v2159 = vpack.c.b16 %v1853, %v1852
    %v2160 = vpack.c.b16 %v1855, %v1854
    %v2161 = vpack.c.b16 %v1857, %v1856
    %v2162 = vpack.c.b16 %v1859, %v1858
    %v2163 = vpack.c.b16 %v1861, %v1860
    %v2164 = vpack.c.b16 %v1863, %v1862
    %v2165 = vpack.c.b16 %v1865, %v1864
    %v2166 = vpack.c.b16 %v1867, %v1866
    %v2167 = vpack.c.b16 %v1869, %v1868
    %v2168 = vpack.c.b16 %v1871, %v1870
    %v2169 = vpack.c.b16 %v1873, %v1872
    %v2170 = vpack.c.b16 %v1875, %v1874
    %v2171 = vpack.c.b16 %v1877, %v1876
    %vm2466 = vcmask 785408
    %v2467 = vsel %vm2466, %v665, 0
    %2469 = vmatpush.bf16.msra.mxu0 %v1885
    %2470 = vmatpush.bf16.msra.mxu0 %v1884
    %2471 = vmatpush.bf16.msra.mxu0 %v1883
    %2472 = vmatpush.bf16.msra.mxu0 %v1882
    %2473 = vmatpush.bf16.msra.mxu0 %v1881
    %2474 = vmatpush.bf16.msra.mxu0 %v1880
    %2475 = vmatpush.bf16.msra.mxu0 %v1879
    %2476 = vmatpush.bf16.msra.mxu0 %v1878
    %2477 = vmatmul.bf16.gmra.mxu0 %v621
    %v2478 = vpop.f32.mrf.mxu0
    %v2479 = vadd.f32 %v617, %v2478
    %v2480 = vpop.f32.mrf.mxu0
    %2481 = vdwg.mxu0
    %2482 = vmatpush.bf16.msra.mxu0 %v1893
    %2483 = vmatpush.bf16.msra.mxu0 %v1892
    %2484 = vmatpush.bf16.msra.mxu0 %v1891
    %2485 = vmatpush.bf16.msra.mxu0 %v1890
    %2486 = vmatpush.bf16.msra.mxu0 %v1889
    %2487 = vmatpush.bf16.msra.mxu0 %v1888
    %2488 = vmatpush.bf16.msra.mxu0 %v1887
    %2489 = vmatpush.bf16.msra.mxu0 %v1886
    %2490 = vmatmul.bf16.gmra.mxu0 %v622
    %v2491 = vpop.f32.mrf.mxu0
    %v2492 = vadd.f32 %v2479, %v2491
    %v2493 = vpop.f32.mrf.mxu0
    %2494 = vdwg.mxu0
    %2495 = vmatpush.bf16.msra.mxu0 %v1901
    %2496 = vmatpush.bf16.msra.mxu0 %v1900
    %2497 = vmatpush.bf16.msra.mxu0 %v1899
    %2498 = vmatpush.bf16.msra.mxu0 %v1898
    %2499 = vmatpush.bf16.msra.mxu0 %v1897
    %2500 = vmatpush.bf16.msra.mxu0 %v1896
    %2501 = vmatpush.bf16.msra.mxu0 %v1895
    %2502 = vmatpush.bf16.msra.mxu0 %v1894
    %2503 = vmatmul.bf16.gmra.mxu0 %v623
    %v2504 = vpop.f32.mrf.mxu0
    %v2505 = vadd.f32 %v2492, %v2504
    %v2506 = vpop.f32.mrf.mxu0
    %2507 = vdwg.mxu0
    %2508 = vmatpush.bf16.msra.mxu0 %v1909
    %2509 = vmatpush.bf16.msra.mxu0 %v1908
    %2510 = vmatpush.bf16.msra.mxu0 %v1907
    %2511 = vmatpush.bf16.msra.mxu0 %v1906
    %2512 = vmatpush.bf16.msra.mxu0 %v1905
    %2513 = vmatpush.bf16.msra.mxu0 %v1904
    %2514 = vmatpush.bf16.msra.mxu0 %v1903
    %2515 = vmatpush.bf16.msra.mxu0 %v1902
    %2516 = vmatmul.bf16.gmra.mxu0 %v624
    %v2517 = vpop.f32.mrf.mxu0
    %v2518 = vadd.f32 %v2505, %v2517
    %v2519 = vpop.f32.mrf.mxu0
    %2520 = vdwg.mxu0
    %2521 = vmatpush.bf16.msra.mxu0 %v1917
    %2522 = vmatpush.bf16.msra.mxu0 %v1916
    %2523 = vmatpush.bf16.msra.mxu0 %v1915
    %2524 = vmatpush.bf16.msra.mxu0 %v1914
    %2525 = vmatpush.bf16.msra.mxu0 %v1913
    %2526 = vmatpush.bf16.msra.mxu0 %v1912
    %2527 = vmatpush.bf16.msra.mxu0 %v1911
    %2528 = vmatpush.bf16.msra.mxu0 %v1910
    %2529 = vmatmul.bf16.gmra.mxu0 %v625
    %v2530 = vpop.f32.mrf.mxu0
    %v2531 = vadd.f32 %v2518, %v2530
    %v2532 = vpop.f32.mrf.mxu0
    %2533 = vdwg.mxu0
    %2534 = vmatpush.bf16.msra.mxu0 %v1925
    %2535 = vmatpush.bf16.msra.mxu0 %v1924
    %2536 = vmatpush.bf16.msra.mxu0 %v1923
    %2537 = vmatpush.bf16.msra.mxu0 %v1922
    %2538 = vmatpush.bf16.msra.mxu0 %v1921
    %2539 = vmatpush.bf16.msra.mxu0 %v1920
    %2540 = vmatpush.bf16.msra.mxu0 %v1919
    %2541 = vmatpush.bf16.msra.mxu0 %v1918
    %2542 = vmatmul.bf16.gmra.mxu0 %v626
    %v2543 = vpop.f32.mrf.mxu0
    %v2544 = vadd.f32 %v2531, %v2543
    %v2545 = vpop.f32.mrf.mxu0
    %2546 = vdwg.mxu0
    %2547 = vmatpush.bf16.msra.mxu0 %v1933
    %2548 = vmatpush.bf16.msra.mxu0 %v1932
    %2549 = vmatpush.bf16.msra.mxu0 %v1931
    %2550 = vmatpush.bf16.msra.mxu0 %v1930
    %2551 = vmatpush.bf16.msra.mxu0 %v1929
    %2552 = vmatpush.bf16.msra.mxu0 %v1928
    %2553 = vmatpush.bf16.msra.mxu0 %v1927
    %2554 = vmatpush.bf16.msra.mxu0 %v1926
    %2555 = vmatmul.bf16.gmra.mxu0 %v627
    %v2556 = vpop.f32.mrf.mxu0
    %v2557 = vadd.f32 %v2544, %v2556
    %v2558 = vpop.f32.mrf.mxu0
    %2559 = vdwg.mxu0
    %2560 = vmatpush.bf16.msra.mxu0 %v1941
    %2561 = vmatpush.bf16.msra.mxu0 %v1940
    %2562 = vmatpush.bf16.msra.mxu0 %v1939
    %2563 = vmatpush.bf16.msra.mxu0 %v1938
    %2564 = vmatpush.bf16.msra.mxu0 %v1937
    %2565 = vmatpush.bf16.msra.mxu0 %v1936
    %2566 = vmatpush.bf16.msra.mxu0 %v1935
    %2567 = vmatpush.bf16.msra.mxu0 %v1934
    %2568 = vmatmul.bf16.gmra.mxu0 %v628
    %v2569 = vpop.f32.mrf.mxu0
    %v2570 = vadd.f32 %v2557, %v2569
    %v2571 = vpop.f32.mrf.mxu0
    %2572 = vdwg.mxu0
    %2573 = vmatpush.bf16.msra.mxu0 %v1949
    %2574 = vmatpush.bf16.msra.mxu0 %v1948
    %2575 = vmatpush.bf16.msra.mxu0 %v1947
    %2576 = vmatpush.bf16.msra.mxu0 %v1946
    %2577 = vmatpush.bf16.msra.mxu0 %v1945
    %2578 = vmatpush.bf16.msra.mxu0 %v1944
    %2579 = vmatpush.bf16.msra.mxu0 %v1943
    %2580 = vmatpush.bf16.msra.mxu0 %v1942
    %2581 = vmatmul.bf16.gmra.mxu0 %v631
    %v2582 = vpop.f32.mrf.mxu0
    %v2583 = vadd.f32 %v2570, %v2582
    %v2584 = vpop.f32.mrf.mxu0
    %2585 = vdwg.mxu0
    %2586 = vmatpush.bf16.msra.mxu0 %v1957
    %2587 = vmatpush.bf16.msra.mxu0 %v1956
    %2588 = vmatpush.bf16.msra.mxu0 %v1955
    %2589 = vmatpush.bf16.msra.mxu0 %v1954
    %2590 = vmatpush.bf16.msra.mxu0 %v1953
    %2591 = vmatpush.bf16.msra.mxu0 %v1952
    %2592 = vmatpush.bf16.msra.mxu0 %v1951
    %2593 = vmatpush.bf16.msra.mxu0 %v1950
    %2594 = vmatmul.bf16.gmra.mxu0 %v632
    %v2595 = vpop.f32.mrf.mxu0
    %v2596 = vadd.f32 %v2583, %v2595
    %v2597 = vpop.f32.mrf.mxu0
    %2598 = vdwg.mxu0
    %2599 = vmatpush.bf16.msra.mxu0 %v1965
    %2600 = vmatpush.bf16.msra.mxu0 %v1964
    %2601 = vmatpush.bf16.msra.mxu0 %v1963
    %2602 = vmatpush.bf16.msra.mxu0 %v1962
    %2603 = vmatpush.bf16.msra.mxu0 %v1961
    %2604 = vmatpush.bf16.msra.mxu0 %v1960
    %2605 = vmatpush.bf16.msra.mxu0 %v1959
    %2606 = vmatpush.bf16.msra.mxu0 %v1958
    %2607 = vmatmul.bf16.gmra.mxu0 %v633
    %v2608 = vpop.f32.mrf.mxu0
    %v2609 = vadd.f32 %v2596, %v2608
    %v2610 = vpop.f32.mrf.mxu0
    %2611 = vdwg.mxu0
    %2612 = vmatpush.bf16.msra.mxu0 %v1973
    %2613 = vmatpush.bf16.msra.mxu0 %v1972
    %2614 = vmatpush.bf16.msra.mxu0 %v1971
    %2615 = vmatpush.bf16.msra.mxu0 %v1970
    %2616 = vmatpush.bf16.msra.mxu0 %v1969
    %2617 = vmatpush.bf16.msra.mxu0 %v1968
    %2618 = vmatpush.bf16.msra.mxu0 %v1967
    %2619 = vmatpush.bf16.msra.mxu0 %v1966
    %2620 = vmatmul.bf16.gmra.mxu0 %v634
    %v2621 = vpop.f32.mrf.mxu0
    %v2622 = vadd.f32 %v2609, %v2621
    %v2623 = vpop.f32.mrf.mxu0
    %2624 = vdwg.mxu0
    %2625 = vmatpush.bf16.msra.mxu0 %v1981
    %2626 = vmatpush.bf16.msra.mxu0 %v1980
    %2627 = vmatpush.bf16.msra.mxu0 %v1979
    %2628 = vmatpush.bf16.msra.mxu0 %v1978
    %2629 = vmatpush.bf16.msra.mxu0 %v1977
    %2630 = vmatpush.bf16.msra.mxu0 %v1976
    %2631 = vmatpush.bf16.msra.mxu0 %v1975
    %2632 = vmatpush.bf16.msra.mxu0 %v1974
    %2633 = vmatmul.bf16.gmra.mxu0 %v635
    %v2634 = vpop.f32.mrf.mxu0
    %v2635 = vadd.f32 %v2622, %v2634
    %v2636 = vpop.f32.mrf.mxu0
    %2637 = vdwg.mxu0
    %2638 = vmatpush.bf16.msra.mxu0 %v1989
    %2639 = vmatpush.bf16.msra.mxu0 %v1988
    %2640 = vmatpush.bf16.msra.mxu0 %v1987
    %2641 = vmatpush.bf16.msra.mxu0 %v1986
    %2642 = vmatpush.bf16.msra.mxu0 %v1985
    %2643 = vmatpush.bf16.msra.mxu0 %v1984
    %2644 = vmatpush.bf16.msra.mxu0 %v1983
    %2645 = vmatpush.bf16.msra.mxu0 %v1982
    %2646 = vmatmul.bf16.gmra.mxu0 %v636
    %v2647 = vpop.f32.mrf.mxu0
    %v2648 = vadd.f32 %v2635, %v2647
    %v2649 = vpop.f32.mrf.mxu0
    %2650 = vdwg.mxu0
    %2651 = vmatpush.bf16.msra.mxu0 %v1997
    %2652 = vmatpush.bf16.msra.mxu0 %v1996
    %2653 = vmatpush.bf16.msra.mxu0 %v1995
    %2654 = vmatpush.bf16.msra.mxu0 %v1994
    %2655 = vmatpush.bf16.msra.mxu0 %v1993
    %2656 = vmatpush.bf16.msra.mxu0 %v1992
    %2657 = vmatpush.bf16.msra.mxu0 %v1991
    %2658 = vmatpush.bf16.msra.mxu0 %v1990
    %2659 = vmatmul.bf16.gmra.mxu0 %v637
    %v2660 = vpop.f32.mrf.mxu0
    %v2661 = vadd.f32 %v2648, %v2660
    %v2662 = vpop.f32.mrf.mxu0
    %2663 = vdwg.mxu0
    %2664 = vmatpush.bf16.msra.mxu0 %v2005
    %2665 = vmatpush.bf16.msra.mxu0 %v2004
    %2666 = vmatpush.bf16.msra.mxu0 %v2003
    %2667 = vmatpush.bf16.msra.mxu0 %v2002
    %2668 = vmatpush.bf16.msra.mxu0 %v2001
    %2669 = vmatpush.bf16.msra.mxu0 %v2000
    %2670 = vmatpush.bf16.msra.mxu0 %v1999
    %2671 = vmatpush.bf16.msra.mxu0 %v1998
    %2672 = vmatmul.bf16.gmra.mxu0 %v638
    %v2673 = vpop.f32.mrf.mxu0
    %v2674 = vadd.f32 %v2661, %v2673
    %v2675 = vpop.f32.mrf.mxu0
    %2676 = vdwg.mxu0
    %2677 = vmatpush.bf16.msra.mxu0 %v2013
    %2678 = vmatpush.bf16.msra.mxu0 %v2012
    %2679 = vmatpush.bf16.msra.mxu0 %v2011
    %2680 = vmatpush.bf16.msra.mxu0 %v2010
    %2681 = vmatpush.bf16.msra.mxu0 %v2009
    %2682 = vmatpush.bf16.msra.mxu0 %v2008
    %2683 = vmatpush.bf16.msra.mxu0 %v2007
    %2684 = vmatpush.bf16.msra.mxu0 %v2006
    %2685 = vmatmul.bf16.gmra.mxu0 %v641
    %v2686 = vpop.f32.mrf.mxu0
    %v2687 = vadd.f32 %v2674, %v2686
    %v2688 = vpop.f32.mrf.mxu0
    %2689 = vdwg.mxu0
    %2690 = vmatpush.bf16.msra.mxu0 %v2021
    %2691 = vmatpush.bf16.msra.mxu0 %v2020
    %2692 = vmatpush.bf16.msra.mxu0 %v2019
    %2693 = vmatpush.bf16.msra.mxu0 %v2018
    %2694 = vmatpush.bf16.msra.mxu0 %v2017
    %2695 = vmatpush.bf16.msra.mxu0 %v2016
    %2696 = vmatpush.bf16.msra.mxu0 %v2015
    %2697 = vmatpush.bf16.msra.mxu0 %v2014
    %2698 = vmatmul.bf16.gmra.mxu0 %v642
    %v2699 = vpop.f32.mrf.mxu0
    %v2700 = vadd.f32 %v2687, %v2699
    %v2701 = vpop.f32.mrf.mxu0
    %2702 = vdwg.mxu0
    %2703 = vmatpush.bf16.msra.mxu0 %v2029
    %2704 = vmatpush.bf16.msra.mxu0 %v2028
    %2705 = vmatpush.bf16.msra.mxu0 %v2027
    %2706 = vmatpush.bf16.msra.mxu0 %v2026
    %2707 = vmatpush.bf16.msra.mxu0 %v2025
    %2708 = vmatpush.bf16.msra.mxu0 %v2024
    %2709 = vmatpush.bf16.msra.mxu0 %v2023
    %2710 = vmatpush.bf16.msra.mxu0 %v2022
    %2711 = vmatmul.bf16.gmra.mxu0 %v643
    %v2712 = vpop.f32.mrf.mxu0
    %v2713 = vadd.f32 %v2700, %v2712
    %v2714 = vpop.f32.mrf.mxu0
    %2715 = vdwg.mxu0
    %2716 = vmatpush.bf16.msra.mxu0 %v2037
    %2717 = vmatpush.bf16.msra.mxu0 %v2036
    %2718 = vmatpush.bf16.msra.mxu0 %v2035
    %2719 = vmatpush.bf16.msra.mxu0 %v2034
    %2720 = vmatpush.bf16.msra.mxu0 %v2033
    %2721 = vmatpush.bf16.msra.mxu0 %v2032
    %2722 = vmatpush.bf16.msra.mxu0 %v2031
    %2723 = vmatpush.bf16.msra.mxu0 %v2030
    %2724 = vmatmul.bf16.gmra.mxu0 %v644
    %v2725 = vpop.f32.mrf.mxu0
    %v2726 = vadd.f32 %v2713, %v2725
    %v2727 = vpop.f32.mrf.mxu0
    %2728 = vdwg.mxu0
    %2729 = vmatpush.bf16.msra.mxu0 %v2045
    %2730 = vmatpush.bf16.msra.mxu0 %v2044
    %2731 = vmatpush.bf16.msra.mxu0 %v2043
    %2732 = vmatpush.bf16.msra.mxu0 %v2042
    %2733 = vmatpush.bf16.msra.mxu0 %v2041
    %2734 = vmatpush.bf16.msra.mxu0 %v2040
    %2735 = vmatpush.bf16.msra.mxu0 %v2039
    %2736 = vmatpush.bf16.msra.mxu0 %v2038
    %2737 = vmatmul.bf16.gmra.mxu0 %v645
    %v2738 = vpop.f32.mrf.mxu0
    %v2739 = vadd.f32 %v2726, %v2738
    %v2740 = vpop.f32.mrf.mxu0
    %2741 = vdwg.mxu0
    %2742 = vmatpush.bf16.msra.mxu0 %v2053
    %2743 = vmatpush.bf16.msra.mxu0 %v2052
    %2744 = vmatpush.bf16.msra.mxu0 %v2051
    %2745 = vmatpush.bf16.msra.mxu0 %v2050
    %2746 = vmatpush.bf16.msra.mxu0 %v2049
    %2747 = vmatpush.bf16.msra.mxu0 %v2048
    %2748 = vmatpush.bf16.msra.mxu0 %v2047
    %2749 = vmatpush.bf16.msra.mxu0 %v2046
    %2750 = vmatmul.bf16.gmra.mxu0 %v646
    %v2751 = vpop.f32.mrf.mxu0
    %v2752 = vadd.f32 %v2739, %v2751
    %v2753 = vpop.f32.mrf.mxu0
    %2754 = vdwg.mxu0
    %2755 = vmatpush.bf16.msra.mxu0 %v2061
    %2756 = vmatpush.bf16.msra.mxu0 %v2060
    %2757 = vmatpush.bf16.msra.mxu0 %v2059
    %2758 = vmatpush.bf16.msra.mxu0 %v2058
    %2759 = vmatpush.bf16.msra.mxu0 %v2057
    %2760 = vmatpush.bf16.msra.mxu0 %v2056
    %2761 = vmatpush.bf16.msra.mxu0 %v2055
    %2762 = vmatpush.bf16.msra.mxu0 %v2054
    %2763 = vmatmul.bf16.gmra.mxu0 %v647
    %v2764 = vpop.f32.mrf.mxu0
    %v2765 = vadd.f32 %v2752, %v2764
    %v2766 = vpop.f32.mrf.mxu0
    %2767 = vdwg.mxu0
    %2768 = vmatpush.bf16.msra.mxu0 %v2069
    %2769 = vmatpush.bf16.msra.mxu0 %v2068
    %2770 = vmatpush.bf16.msra.mxu0 %v2067
    %2771 = vmatpush.bf16.msra.mxu0 %v2066
    %2772 = vmatpush.bf16.msra.mxu0 %v2065
    %2773 = vmatpush.bf16.msra.mxu0 %v2064
    %2774 = vmatpush.bf16.msra.mxu0 %v2063
    %2775 = vmatpush.bf16.msra.mxu0 %v2062
    %2776 = vmatmul.bf16.gmra.mxu0 %v648
    %v2777 = vpop.f32.mrf.mxu0
    %v2778 = vadd.f32 %v2765, %v2777
    %v2779 = vpop.f32.mrf.mxu0
    %2780 = vdwg.mxu0
    %2781 = vmatpush.bf16.msra.mxu0 %v2077
    %2782 = vmatpush.bf16.msra.mxu0 %v2076
    %2783 = vmatpush.bf16.msra.mxu0 %v2075
    %2784 = vmatpush.bf16.msra.mxu0 %v2074
    %2785 = vmatpush.bf16.msra.mxu0 %v2073
    %2786 = vmatpush.bf16.msra.mxu0 %v2072
    %2787 = vmatpush.bf16.msra.mxu0 %v2071
    %2788 = vmatpush.bf16.msra.mxu0 %v2070
    %2789 = vmatmul.bf16.gmra.mxu0 %v651
    %v2790 = vpop.f32.mrf.mxu0
    %v2791 = vadd.f32 %v2778, %v2790
    %v2792 = vpop.f32.mrf.mxu0
    %2793 = vdwg.mxu0
    %2794 = vmatpush.bf16.msra.mxu0 %v2085
    %2795 = vmatpush.bf16.msra.mxu0 %v2084
    %2796 = vmatpush.bf16.msra.mxu0 %v2083
    %2797 = vmatpush.bf16.msra.mxu0 %v2082
    %2798 = vmatpush.bf16.msra.mxu0 %v2081
    %2799 = vmatpush.bf16.msra.mxu0 %v2080
    %2800 = vmatpush.bf16.msra.mxu0 %v2079
    %2801 = vmatpush.bf16.msra.mxu0 %v2078
    %2802 = vmatmul.bf16.gmra.mxu0 %v652
    %v2803 = vpop.f32.mrf.mxu0
    %v2804 = vadd.f32 %v2791, %v2803
    %v2805 = vpop.f32.mrf.mxu0
    %2806 = vdwg.mxu0
    %2807 = vmatpush.bf16.msra.mxu0 %v2093
    %2808 = vmatpush.bf16.msra.mxu0 %v2092
    %2809 = vmatpush.bf16.msra.mxu0 %v2091
    %2810 = vmatpush.bf16.msra.mxu0 %v2090
    %2811 = vmatpush.bf16.msra.mxu0 %v2089
    %2812 = vmatpush.bf16.msra.mxu0 %v2088
    %2813 = vmatpush.bf16.msra.mxu0 %v2087
    %2814 = vmatpush.bf16.msra.mxu0 %v2086
    %2815 = vmatmul.bf16.gmra.mxu0 %v653
    %v2816 = vpop.f32.mrf.mxu0
    %v2817 = vadd.f32 %v2804, %v2816
    %v2818 = vpop.f32.mrf.mxu0
    %2819 = vdwg.mxu0
    %2820 = vmatpush.bf16.msra.mxu0 %v2101
    %2821 = vmatpush.bf16.msra.mxu0 %v2100
    %2822 = vmatpush.bf16.msra.mxu0 %v2099
    %2823 = vmatpush.bf16.msra.mxu0 %v2098
    %2824 = vmatpush.bf16.msra.mxu0 %v2097
    %2825 = vmatpush.bf16.msra.mxu0 %v2096
    %2826 = vmatpush.bf16.msra.mxu0 %v2095
    %2827 = vmatpush.bf16.msra.mxu0 %v2094
    %2828 = vmatmul.bf16.gmra.mxu0 %v654
    %v2829 = vpop.f32.mrf.mxu0
    %v2830 = vadd.f32 %v2817, %v2829
    %v2831 = vpop.f32.mrf.mxu0
    %2832 = vdwg.mxu0
    %2833 = vmatpush.bf16.msra.mxu0 %v2109
    %2834 = vmatpush.bf16.msra.mxu0 %v2108
    %2835 = vmatpush.bf16.msra.mxu0 %v2107
    %2836 = vmatpush.bf16.msra.mxu0 %v2106
    %2837 = vmatpush.bf16.msra.mxu0 %v2105
    %2838 = vmatpush.bf16.msra.mxu0 %v2104
    %2839 = vmatpush.bf16.msra.mxu0 %v2103
    %2840 = vmatpush.bf16.msra.mxu0 %v2102
    %2841 = vmatmul.bf16.gmra.mxu0 %v655
    %v2842 = vpop.f32.mrf.mxu0
    %v2843 = vadd.f32 %v2830, %v2842
    %v2844 = vpop.f32.mrf.mxu0
    %2845 = vdwg.mxu0
    %2846 = vmatpush.bf16.msra.mxu0 %v2117
    %2847 = vmatpush.bf16.msra.mxu0 %v2116
    %2848 = vmatpush.bf16.msra.mxu0 %v2115
    %2849 = vmatpush.bf16.msra.mxu0 %v2114
    %2850 = vmatpush.bf16.msra.mxu0 %v2113
    %2851 = vmatpush.bf16.msra.mxu0 %v2112
    %2852 = vmatpush.bf16.msra.mxu0 %v2111
    %2853 = vmatpush.bf16.msra.mxu0 %v2110
    %2854 = vmatmul.bf16.gmra.mxu0 %v656
    %v2855 = vpop.f32.mrf.mxu0
    %v2856 = vadd.f32 %v2843, %v2855
    %v2857 = vpop.f32.mrf.mxu0
    %2858 = vdwg.mxu0
    %2859 = vmatpush.bf16.msra.mxu0 %v2125
    %2860 = vmatpush.bf16.msra.mxu0 %v2124
    %2861 = vmatpush.bf16.msra.mxu0 %v2123
    %2862 = vmatpush.bf16.msra.mxu0 %v2122
    %2863 = vmatpush.bf16.msra.mxu0 %v2121
    %2864 = vmatpush.bf16.msra.mxu0 %v2120
    %2865 = vmatpush.bf16.msra.mxu0 %v2119
    %2866 = vmatpush.bf16.msra.mxu0 %v2118
    %2867 = vmatmul.bf16.gmra.mxu0 %v657
    %v2868 = vpop.f32.mrf.mxu0
    %v2869 = vadd.f32 %v2856, %v2868
    %v2870 = vpop.f32.mrf.mxu0
    %2871 = vdwg.mxu0
    %2872 = vmatpush.bf16.msra.mxu0 %v2133
    %2873 = vmatpush.bf16.msra.mxu0 %v2132
    %2874 = vmatpush.bf16.msra.mxu0 %v2131
    %2875 = vmatpush.bf16.msra.mxu0 %v2130
    %2876 = vmatpush.bf16.msra.mxu0 %v2129
    %2877 = vmatpush.bf16.msra.mxu0 %v2128
    %2878 = vmatpush.bf16.msra.mxu0 %v2127
    %2879 = vmatpush.bf16.msra.mxu0 %v2126
    %2880 = vmatmul.bf16.gmra.mxu0 %v658
    %v2881 = vpop.f32.mrf.mxu0
    %v2882 = vadd.f32 %v2869, %v2881
    %v2883 = vpop.f32.mrf.mxu0
    %2884 = vdwg.mxu0
    %2885 = vmatpush.bf16.msra.mxu0 %v2141
    %2886 = vmatpush.bf16.msra.mxu0 %v2140
    %2887 = vmatpush.bf16.msra.mxu0 %v2139
    %2888 = vmatpush.bf16.msra.mxu0 %v2138
    %2889 = vmatpush.bf16.msra.mxu0 %v2137
    %2890 = vmatpush.bf16.msra.mxu0 %v2136
    %2891 = vmatpush.bf16.msra.mxu0 %v2135
    %2892 = vmatpush.bf16.msra.mxu0 %v2134
    %2893 = vmatmul.bf16.gmra.mxu0 %v661
    %v2894 = vpop.f32.mrf.mxu0
    %v2895 = vadd.f32 %v2882, %v2894
    %v2896 = vpop.f32.mrf.mxu0
    %2897 = vdwg.mxu0
    %2898 = vmatpush.bf16.msra.mxu0 %v2149
    %2899 = vmatpush.bf16.msra.mxu0 %v2148
    %2900 = vmatpush.bf16.msra.mxu0 %v2147
    %2901 = vmatpush.bf16.msra.mxu0 %v2146
    %2902 = vmatpush.bf16.msra.mxu0 %v2145
    %2903 = vmatpush.bf16.msra.mxu0 %v2144
    %2904 = vmatpush.bf16.msra.mxu0 %v2143
    %2905 = vmatpush.bf16.msra.mxu0 %v2142
    %2906 = vmatmul.bf16.gmra.mxu0 %v662
    %v2907 = vpop.f32.mrf.mxu0
    %v2908 = vadd.f32 %v2895, %v2907
    %v2909 = vpop.f32.mrf.mxu0
    %2910 = vdwg.mxu0
    %2911 = vmatpush.bf16.msra.mxu0 %v2157
    %2912 = vmatpush.bf16.msra.mxu0 %v2156
    %2913 = vmatpush.bf16.msra.mxu0 %v2155
    %2914 = vmatpush.bf16.msra.mxu0 %v2154
    %2915 = vmatpush.bf16.msra.mxu0 %v2153
    %2916 = vmatpush.bf16.msra.mxu0 %v2152
    %2917 = vmatpush.bf16.msra.mxu0 %v2151
    %2918 = vmatpush.bf16.msra.mxu0 %v2150
    %2919 = vmatmul.bf16.gmra.mxu0 %v663
    %v2920 = vpop.f32.mrf.mxu0
    %v2921 = vadd.f32 %v2908, %v2920
    %v2922 = vpop.f32.mrf.mxu0
    %2923 = vdwg.mxu0
    %2924 = vmatpush.bf16.msra.mxu0 %v2165
    %2925 = vmatpush.bf16.msra.mxu0 %v2164
    %2926 = vmatpush.bf16.msra.mxu0 %v2163
    %2927 = vmatpush.bf16.msra.mxu0 %v2162
    %2928 = vmatpush.bf16.msra.mxu0 %v2161
    %2929 = vmatpush.bf16.msra.mxu0 %v2160
    %2930 = vmatpush.bf16.msra.mxu0 %v2159
    %2931 = vmatpush.bf16.msra.mxu0 %v2158
    %2932 = vmatmul.bf16.gmra.mxu0 %v664
    %v2933 = vpop.f32.mrf.mxu0
    %v2934 = vadd.f32 %v2921, %v2933
    %v2935 = vpop.f32.mrf.mxu0
    %2936 = vdwg.mxu0
    %2937 = vmatpush.bf16.msra.mxu0 0
    %2938 = vmatpush.bf16.msra.mxu0 0
    %2939 = vmatpush.bf16.msra.mxu0 %v2171
    %2940 = vmatpush.bf16.msra.mxu0 %v2170
    %2941 = vmatpush.bf16.msra.mxu0 %v2169
    %2942 = vmatpush.bf16.msra.mxu0 %v2168
    %2943 = vmatpush.bf16.msra.mxu0 %v2167
    %2944 = vmatpush.bf16.msra.mxu0 %v2166
    %2945 = vmatmul.bf16.gmra.mxu0 %v2467
    %v2946 = vpop.f32.mrf.mxu0
    %v2947 = vadd.f32 %v2934, %v2946
    %v2948 = vpop.f32.mrf.mxu0
    %2949 = vdwg.mxu0
    %v2950 = vmax.f32 %v2947, 0.0
    %v2951 = vpack.c.bf16 %v2950, %v2950
    %v2952 = vld [vmem:[%s3] sm:$0xf]
    %v2953 = vld [vmem:[%s3 + $0x4] sm:$0xf]
    %v2954 = vld [vmem:[%s3 + $0x8] sm:$0xf]
    %v2955 = vld [vmem:[%s3 + $0xc] sm:$0xf]
    %v2956 = vld [vmem:[%s3 + $0x10] sm:$0xf]
    %v2957 = vld [vmem:[%s3 + $0x14] sm:$0xf]
    %v2958 = vld [vmem:[%s3 + $0x18] sm:$0xf]
    %v2959 = vld [vmem:[%s3 + $0x1c] sm:$0xf]
    %v2960 = vld [vmem:[%s4] sm:$0x1]
    %v2962 = vperm.slane %v2960, 0
    %v2972 = vunpack.c.l.b16 %v2952
    %v2973 = vunpack.c.l.b16 %v2953
    %v2974 = vunpack.c.l.b16 %v2954
    %v2975 = vunpack.c.l.b16 %v2955
    %v2976 = vunpack.c.l.b16 %v2956
    %v2977 = vunpack.c.l.b16 %v2957
    %v2978 = vunpack.c.l.b16 %v2958
    %v2979 = vunpack.c.l.b16 %v2959
    %v2980 = vpack.c.b16 %v2973, %v2972
    %v2981 = vpack.c.b16 %v2975, %v2974
    %v2982 = vpack.c.b16 %v2977, %v2976
    %v2983 = vpack.c.b16 %v2979, %v2978
    %vm2988 = vcmask 523264
    %v2990 = vsel %vm2988, %v2951, 0
    %2992 = vmatpush.bf16.msra.mxu0 0
    %2993 = vmatpush.bf16.msra.mxu0 0
    %2994 = vmatpush.bf16.msra.mxu0 0
    %2995 = vmatpush.bf16.msra.mxu0 0
    %2996 = vmatpush.bf16.msra.mxu0 %v2983
    %2997 = vmatpush.bf16.msra.mxu0 %v2982
    %2998 = vmatpush.bf16.msra.mxu0 %v2981
    %2999 = vmatpush.bf16.msra.mxu0 %v2980
    %3000 = vmatmul.bf16.gmra.mxu0 %v2990
    %v3001 = vpop.f32.mrf.mxu0
    %v3002 = vadd.f32 %v2962, %v3001
    %v3003 = vpop.f32.mrf.mxu0
    %3004 = vdwg.mxu0
    %3005 = vst [vmem:[#allocation2] sm:$0x3] %v3002
    // Predicated region
    $region22: #{model_fc_forward.3} parent=1 // pred_check
      _
    $region23: #{model_fc_forward.3} parent=1 // pred_check_branch
      %3007 = sbr.rel (0) target = $region25
    $region24: #{model_fc_forward.3} parent=1 // pred_region
      %3009 = vsyncadd [#allocation3], 0
      %s3011 = sshll.u32 [#allocation2], 4
      %s3012 = int_to_ptr.vmem [resolvable:$true] %s3011
      %s3013 = sshll.u32 %s5, 4
      %s3014 = int_to_ptr.hbm [resolvable:$true] %s3013
      %3016 = dma.vmem_to_hbm [thread:$0]  %s3012, 32, %s3014, [#allocation3]
    $region25: #{model_fc_forward.3} parent=1 // pred_fallthru
      _
    // Predicated region
    $region26: #{model_fc_forward.3} parent=1 // pred_check
      _
    $region27: #{model_fc_forward.3} parent=1 // pred_check_branch
      %3018 = sbr.rel (0) target = $region29
    $region28: #{model_fc_forward.3} parent=1 // pred_region
      %3020 = dma.done [#allocation3], 32
    $region29: #{model_fc_forward.3} parent=1 // pred_fallthru
      _
    %3021 = vsyncpa [#allocation3], 1

</llo_original>
